<compile_context>
chip_gen: v7x
topology: tpu7x:2x2x1
jax: 0.10.0
libtpu: 0.0.40
codegen_flags: <defaults>
</compile_context>

<pallas_src>
import functools

import jax
import jax.numpy as jnp
from jax.experimental import pallas as pl
from jax.experimental.pallas import tpu as pltpu


def _conv2dsame_kernel(x_ref, w_ref, o_ref, pad_ref, patch_ref, *,
                       H, W, K, Cin, ka, kb):
    # x_ref     : (1, Cin, H*W)          raw (unpadded) flattened image
    # w_ref     : (Cout, K*K*Cin + 1)    fused weights, last column = bias
    # o_ref     : (1, Cout, L)           flattened padded-grid output
    # pad_ref   : (Cin, Hp*Wp)  VMEM     reflection-padded plane (built here)
    # patch_ref : (K*K*Cin+1, L) VMEM    im2col patch (+ ones row for bias)
    Hp = H + ka + kb
    Wp = W + ka + kb
    L = (H - 1) * Wp + W          # flattened padded-grid positions we compute
    KK = K * K

    # ---- 1) fused ReflectionPad2d: assemble (Cin, Hp*Wp) in VMEM ----------
    def _reflect(i):              # static Python reflection of a row index
        if i < 0:
            return -i
        if i > H - 1:
            return 2 * (H - 1) - i
        return i

    for r in range(Hp):           # static unroll; Hp is small
        rr = _reflect(r - ka)     # source (unpadded) row
        dst = r * Wp
        src = rr * W
        # body of the row
        pad_ref[:, dst + ka: dst + ka + W] = x_ref[0, :, src: src + W]
        # left reflected columns: padded col j <- original col (ka - j)
        for j in range(ka):
            c = src + (ka - j)
            pad_ref[:, dst + j: dst + j + 1] = x_ref[0, :, c: c + 1]
        # right reflected columns: padded col ka+W+j <- original col (W-2-j)
        for j in range(kb):
            c = src + (W - 2 - j)
            d = dst + ka + W + j
            pad_ref[:, d: d + 1] = x_ref[0, :, c: c + 1]

    # ---- 2) im2col: each tap is a uniform lane shift of the flat plane ----
    for kh in range(K):
        for kw in range(K):
            t = kh * K + kw
            off = kh * Wp + kw
            patch_ref[t * Cin:(t + 1) * Cin, :] = pad_ref[:, off: off + L]
    # bias row: constant ones (bias itself lives in w_ref's last column)
    patch_ref[KK * Cin: KK * Cin + 1, :] = jnp.ones((1, L), jnp.float32)

    # ---- 3) single fused MXU matmul (conv + bias in one contraction) ------
    out = jnp.dot(w_ref[...], patch_ref[...],
                  preferred_element_type=jnp.float32)
    o_ref[0] = out.astype(o_ref.dtype)


def conv2d_same(x_nchw, weight, bias, kernel_size):
    """Equivalent of Conv2dSame.forward (ReflectionPad2d((ka,kb,ka,kb)) + Conv2d).

    x_nchw : (N, Cin, H, W)     float32
    weight : (Cout, Cin, K, K)  PyTorch conv weight layout (cross-correlation)
    bias   : (Cout,)
    """
    N, Cin, H, W = x_nchw.shape
    Cout = weight.shape[0]
    K = kernel_size
    ka = K // 2
    kb = ka - 1 if K % 2 == 0 else ka
    Hp, Wp = H + ka + kb, W + ka + kb
    HW = H * W
    L = (H - 1) * Wp + W
    KKC = K * K * Cin

    # Free reshape: spatially-flattened NCHW (channels stay on sublanes).
    x_flat = x_nchw.reshape(N, Cin, HW)

    # (Cout, Cin, K, K) -> (Cout, K*K*Cin) with (kh, kw, ci) contraction order
    # (no kernel flip: PyTorch conv is cross-correlation), plus the bias as an
    # extra column so the bias-add rides the MXU matmul for free.
    w2d = jnp.transpose(weight, (0, 2, 3, 1)).reshape(Cout, KKC)
    w_aug = jnp.concatenate([w2d, bias.reshape(Cout, 1)],
                            axis=1).astype(jnp.float32)

    kernel = functools.partial(_conv2dsame_kernel,
                               H=H, W=W, K=K, Cin=Cin, ka=ka, kb=kb)

    out_flat = pl.pallas_call(
        kernel,
        out_shape=jax.ShapeDtypeStruct((N, Cout, L), x_nchw.dtype),
        grid_spec=pltpu.PrefetchScalarGridSpec(
            num_scalar_prefetch=0,
            grid=(N,),
            in_specs=[
                pl.BlockSpec((1, Cin, HW), lambda n: (n, 0, 0)),
                pl.BlockSpec((Cout, KKC + 1), lambda n: (0, 0)),
            ],
            out_specs=pl.BlockSpec((1, Cout, L), lambda n: (n, 0, 0)),
            scratch_shapes=[
                pltpu.VMEM((Cin, Hp * Wp), jnp.float32),   # padded plane
                pltpu.VMEM((KKC + 1, L), jnp.float32),     # im2col patch
            ],
        ),
        compiler_params=pltpu.CompilerParams(
            dimension_semantics=("parallel",)),
    )(x_flat, w_aug)

    # out_flat[n, co, h*Wp + w] holds the result for output pixel (h, w);
    # columns with w >= W are throwaway. Pad tail, reshape, slice (cheap XLA).
    out = jnp.pad(out_flat, ((0, 0), (0, 0), (0, H * Wp - L)))
    return out.reshape(N, Cout, H, Wp)[:, :, :, :W]


def _reference(x_nchw, weight, bias, kernel_size):
    K = kernel_size
    ka = K // 2
    kb = ka - 1 if K % 2 == 0 else ka
    x_pad = jnp.pad(x_nchw, ((0, 0), (0, 0), (ka, kb), (ka, kb)),
                    mode="reflect")
    out = jax.lax.conv_general_dilated(
        x_pad, weight, window_strides=(1, 1), padding="VALID",
        dimension_numbers=("NCHW", "OIHW", "NCHW"))
    return out + bias.reshape(1, -1, 1, 1)


if __name__ == "__main__":
    # Conv2dSame(in_channels=4, out_channels=8, kernel_size=3, bias=True)
    N, Cin, H, W = 2, 4, 16, 16
    Cout, K = 8, 3

    key = jax.random.PRNGKey(0)
    kx, kw_, kb_ = jax.random.split(key, 3)
    x = jax.random.normal(kx, (N, Cin, H, W), dtype=jnp.float32)
    weight = jax.random.normal(kw_, (Cout, Cin, K, K), dtype=jnp.float32) * 0.1
    bias = jax.random.normal(kb_, (Cout,), dtype=jnp.float32) * 0.1

    out = conv2d_same(x, weight, bias, K)
    out = jax.block_until_ready(out)

    ref = _reference(x, weight, bias, K)
    assert out.shape == (N, Cout, H, W)
    assert jnp.allclose(out, ref, atol=1e-4, rtol=1e-4)

    print("KERNEL_OK")
</pallas_src>

<mosaic_0001>
module attributes {stable_mosaic.version = 11 : i64} {
  func.func @_conv2dsame_kernel(%arg0: i32, %arg1: memref<1x4x256xf32, #tpu.memory_space<vmem>>, %arg2: memref<8x37xf32, #tpu.memory_space<vmem>>, %arg3: memref<1x8x286xf32, #tpu.memory_space<vmem>>, %arg4: memref<4x324xf32, #tpu.memory_space<vmem>>, %arg5: memref<37x286xf32, #tpu.memory_space<vmem>>) attributes {dimension_semantics = [#tpu.dimension_semantics<parallel>], iteration_bounds = array<i64: 2>, scalar_prefetch = 0 : i64, scratch_operands = 2 : i64, tpu.core_type = #tpu.core_type<tc>, window_params = [{transform_indices = @transform_0, window_bounds = array<i64: 1, 4, 256>}, {pipeline_mode = #tpu.pipeline_mode<synchronous>, transform_indices = @transform_1, window_bounds = array<i64: 8, 37>}, {transform_indices = @transform_2, window_bounds = array<i64: 1, 8, 286>}]} {
    %c0 = arith.constant 0 : index
    %c0_0 = arith.constant 0 : index
    %c16 = arith.constant 16 : index
    %0 = vector.load %arg1[%c0, %c0_0, %c16] : memref<1x4x256xf32, #tpu.memory_space<vmem>>, vector<1x4x16xf32>
    %1 = vector.shape_cast %0 : vector<1x4x16xf32> to vector<4x16xf32>
    %c0_1 = arith.constant 0 : index
    %c1 = arith.constant 1 : index
    %2 = vector.load %arg4[%c0_1, %c1] : memref<4x324xf32, #tpu.memory_space<vmem>>, vector<4x16xf32>
    tpu.vector_store %arg4[%c0_1, %c1], %1 {strides = array<i32>} : memref<4x324xf32, #tpu.memory_space<vmem>>, vector<4x16xf32>,
    %c0_2 = arith.constant 0 : index
    %c0_3 = arith.constant 0 : index
    %c17 = arith.constant 17 : index
    %3 = vector.load %arg1[%c0_2, %c0_3, %c17] : memref<1x4x256xf32, #tpu.memory_space<vmem>>, vector<1x4x1xf32>
    %4 = vector.shape_cast %3 : vector<1x4x1xf32> to vector<4x1xf32>
    %c0_4 = arith.constant 0 : index
    %c0_5 = arith.constant 0 : index
    %5 = vector.load %arg4[%c0_4, %c0_5] : memref<4x324xf32, #tpu.memory_space<vmem>>, vector<4x1xf32>
    tpu.vector_store %arg4[%c0_4, %c0_5], %4 {strides = array<i32>} : memref<4x324xf32, #tpu.memory_space<vmem>>, vector<4x1xf32>,
    %c0_6 = arith.constant 0 : index
    %c0_7 = arith.constant 0 : index
    %c30 = arith.constant 30 : index
    %6 = vector.load %arg1[%c0_6, %c0_7, %c30] : memref<1x4x256xf32, #tpu.memory_space<vmem>>, vector<1x4x1xf32>
    %7 = vector.shape_cast %6 : vector<1x4x1xf32> to vector<4x1xf32>
    %c0_8 = arith.constant 0 : index
    %c17_9 = arith.constant 17 : index
    %8 = vector.load %arg4[%c0_8, %c17_9] : memref<4x324xf32, #tpu.memory_space<vmem>>, vector<4x1xf32>
    tpu.vector_store %arg4[%c0_8, %c17_9], %7 {strides = array<i32>} : memref<4x324xf32, #tpu.memory_space<vmem>>, vector<4x1xf32>,
    %c0_10 = arith.constant 0 : index
    %c0_11 = arith.constant 0 : index
    %c0_12 = arith.constant 0 : index
    %9 = vector.load %arg1[%c0_10, %c0_11, %c0_12] : memref<1x4x256xf32, #tpu.memory_space<vmem>>, vector<1x4x16xf32>
    %10 = vector.shape_cast %9 : vector<1x4x16xf32> to vector<4x16xf32>
    %c0_13 = arith.constant 0 : index
    %c19 = arith.constant 19 : index
    %11 = vector.load %arg4[%c0_13, %c19] : memref<4x324xf32, #tpu.memory_space<vmem>>, vector<4x16xf32>
    tpu.vector_store %arg4[%c0_13, %c19], %10 {strides = array<i32>} : memref<4x324xf32, #tpu.memory_space<vmem>>, vector<4x16xf32>,
    %c0_14 = arith.constant 0 : index
    %c0_15 = arith.constant 0 : index
    %c1_16 = arith.constant 1 : index
    %12 = vector.load %arg1[%c0_14, %c0_15, %c1_16] : memref<1x4x256xf32, #tpu.memory_space<vmem>>, vector<1x4x1xf32>
    %13 = vector.shape_cast %12 : vector<1x4x1xf32> to vector<4x1xf32>
    %c0_17 = arith.constant 0 : index
    %c18 = arith.constant 18 : index
    %14 = vector.load %arg4[%c0_17, %c18] : memref<4x324xf32, #tpu.memory_space<vmem>>, vector<4x1xf32>
    tpu.vector_store %arg4[%c0_17, %c18], %13 {strides = array<i32>} : memref<4x324xf32, #tpu.memory_space<vmem>>, vector<4x1xf32>,
    %c0_18 = arith.constant 0 : index
    %c0_19 = arith.constant 0 : index
    %c14 = arith.constant 14 : index
    %15 = vector.load %arg1[%c0_18, %c0_19, %c14] : memref<1x4x256xf32, #tpu.memory_space<vmem>>, vector<1x4x1xf32>
    %16 = vector.shape_cast %15 : vector<1x4x1xf32> to vector<4x1xf32>
    %c0_20 = arith.constant 0 : index
    %c35 = arith.constant 35 : index
    %17 = vector.load %arg4[%c0_20, %c35] : memref<4x324xf32, #tpu.memory_space<vmem>>, vector<4x1xf32>
    tpu.vector_store %arg4[%c0_20, %c35], %16 {strides = array<i32>} : memref<4x324xf32, #tpu.memory_space<vmem>>, vector<4x1xf32>,
    %c0_21 = arith.constant 0 : index
    %c0_22 = arith.constant 0 : index
    %c16_23 = arith.constant 16 : index
    %18 = vector.load %arg1[%c0_21, %c0_22, %c16_23] : memref<1x4x256xf32, #tpu.memory_space<vmem>>, vector<1x4x16xf32>
    %19 = vector.shape_cast %18 : vector<1x4x16xf32> to vector<4x16xf32>
    %c0_24 = arith.constant 0 : index
    %c37 = arith.constant 37 : index
    %20 = vector.load %arg4[%c0_24, %c37] : memref<4x324xf32, #tpu.memory_space<vmem>>, vector<4x16xf32>
    tpu.vector_store %arg4[%c0_24, %c37], %19 {strides = array<i32>} : memref<4x324xf32, #tpu.memory_space<vmem>>, vector<4x16xf32>,
    %c0_25 = arith.constant 0 : index
    %c0_26 = arith.constant 0 : index
    %c17_27 = arith.constant 17 : index
    %21 = vector.load %arg1[%c0_25, %c0_26, %c17_27] : memref<1x4x256xf32, #tpu.memory_space<vmem>>, vector<1x4x1xf32>
    %22 = vector.shape_cast %21 : vector<1x4x1xf32> to vector<4x1xf32>
    %c0_28 = arith.constant 0 : index
    %c36 = arith.constant 36 : index
    %23 = vector.load %arg4[%c0_28, %c36] : memref<4x324xf32, #tpu.memory_space<vmem>>, vector<4x1xf32>
    tpu.vector_store %arg4[%c0_28, %c36], %22 {strides = array<i32>} : memref<4x324xf32, #tpu.memory_space<vmem>>, vector<4x1xf32>,
    %c0_29 = arith.constant 0 : index
    %c0_30 = arith.constant 0 : index
    %c30_31 = arith.constant 30 : index
    %24 = vector.load %arg1[%c0_29, %c0_30, %c30_31] : memref<1x4x256xf32, #tpu.memory_space<vmem>>, vector<1x4x1xf32>
    %25 = vector.shape_cast %24 : vector<1x4x1xf32> to vector<4x1xf32>
    %c0_32 = arith.constant 0 : index
    %c53 = arith.constant 53 : index
    %26 = vector.load %arg4[%c0_32, %c53] : memref<4x324xf32, #tpu.memory_space<vmem>>, vector<4x1xf32>
    tpu.vector_store %arg4[%c0_32, %c53], %25 {strides = array<i32>} : memref<4x324xf32, #tpu.memory_space<vmem>>, vector<4x1xf32>,
    %c0_33 = arith.constant 0 : index
    %c0_34 = arith.constant 0 : index
    %c32 = arith.constant 32 : index
    %27 = vector.load %arg1[%c0_33, %c0_34, %c32] : memref<1x4x256xf32, #tpu.memory_space<vmem>>, vector<1x4x16xf32>
    %28 = vector.shape_cast %27 : vector<1x4x16xf32> to vector<4x16xf32>
    %c0_35 = arith.constant 0 : index
    %c55 = arith.constant 55 : index
    %29 = vector.load %arg4[%c0_35, %c55] : memref<4x324xf32, #tpu.memory_space<vmem>>, vector<4x16xf32>
    tpu.vector_store %arg4[%c0_35, %c55], %28 {strides = array<i32>} : memref<4x324xf32, #tpu.memory_space<vmem>>, vector<4x16xf32>,
    %c0_36 = arith.constant 0 : index
    %c0_37 = arith.constant 0 : index
    %c33 = arith.constant 33 : index
    %30 = vector.load %arg1[%c0_36, %c0_37, %c33] : memref<1x4x256xf32, #tpu.memory_space<vmem>>, vector<1x4x1xf32>
    %31 = vector.shape_cast %30 : vector<1x4x1xf32> to vector<4x1xf32>
    %c0_38 = arith.constant 0 : index
    %c54 = arith.constant 54 : index
    %32 = vector.load %arg4[%c0_38, %c54] : memref<4x324xf32, #tpu.memory_space<vmem>>, vector<4x1xf32>
    tpu.vector_store %arg4[%c0_38, %c54], %31 {strides = array<i32>} : memref<4x324xf32, #tpu.memory_space<vmem>>, vector<4x1xf32>,
    %c0_39 = arith.constant 0 : index
    %c0_40 = arith.constant 0 : index
    %c46 = arith.constant 46 : index
    %33 = vector.load %arg1[%c0_39, %c0_40, %c46] : memref<1x4x256xf32, #tpu.memory_space<vmem>>, vector<1x4x1xf32>
    %34 = vector.shape_cast %33 : vector<1x4x1xf32> to vector<4x1xf32>
    %c0_41 = arith.constant 0 : index
    %c71 = arith.constant 71 : index
    %35 = vector.load %arg4[%c0_41, %c71] : memref<4x324xf32, #tpu.memory_space<vmem>>, vector<4x1xf32>
    tpu.vector_store %arg4[%c0_41, %c71], %34 {strides = array<i32>} : memref<4x324xf32, #tpu.memory_space<vmem>>, vector<4x1xf32>,
    %c0_42 = arith.constant 0 : index
    %c0_43 = arith.constant 0 : index
    %c48 = arith.constant 48 : index
    %36 = vector.load %arg1[%c0_42, %c0_43, %c48] : memref<1x4x256xf32, #tpu.memory_space<vmem>>, vector<1x4x16xf32>
    %37 = vector.shape_cast %36 : vector<1x4x16xf32> to vector<4x16xf32>
    %c0_44 = arith.constant 0 : index
    %c73 = arith.constant 73 : index
    %38 = vector.load %arg4[%c0_44, %c73] : memref<4x324xf32, #tpu.memory_space<vmem>>, vector<4x16xf32>
    tpu.vector_store %arg4[%c0_44, %c73], %37 {strides = array<i32>} : memref<4x324xf32, #tpu.memory_space<vmem>>, vector<4x16xf32>,
    %c0_45 = arith.constant 0 : index
    %c0_46 = arith.constant 0 : index
    %c49 = arith.constant 49 : index
    %39 = vector.load %arg1[%c0_45, %c0_46, %c49] : memref<1x4x256xf32, #tpu.memory_space<vmem>>, vector<1x4x1xf32>
    %40 = vector.shape_cast %39 : vector<1x4x1xf32> to vector<4x1xf32>
    %c0_47 = arith.constant 0 : index
    %c72 = arith.constant 72 : index
    %41 = vector.load %arg4[%c0_47, %c72] : memref<4x324xf32, #tpu.memory_space<vmem>>, vector<4x1xf32>
    tpu.vector_store %arg4[%c0_47, %c72], %40 {strides = array<i32>} : memref<4x324xf32, #tpu.memory_space<vmem>>, vector<4x1xf32>,
    %c0_48 = arith.constant 0 : index
    %c0_49 = arith.constant 0 : index
    %c62 = arith.constant 62 : index
    %42 = vector.load %arg1[%c0_48, %c0_49, %c62] : memref<1x4x256xf32, #tpu.memory_space<vmem>>, vector<1x4x1xf32>
    %43 = vector.shape_cast %42 : vector<1x4x1xf32> to vector<4x1xf32>
    %c0_50 = arith.constant 0 : index
    %c89 = arith.constant 89 : index
    %44 = vector.load %arg4[%c0_50, %c89] : memref<4x324xf32, #tpu.memory_space<vmem>>, vector<4x1xf32>
    tpu.vector_store %arg4[%c0_50, %c89], %43 {strides = array<i32>} : memref<4x324xf32, #tpu.memory_space<vmem>>, vector<4x1xf32>,
    %c0_51 = arith.constant 0 : index
    %c0_52 = arith.constant 0 : index
    %c64 = arith.constant 64 : index
    %45 = vector.load %arg1[%c0_51, %c0_52, %c64] : memref<1x4x256xf32, #tpu.memory_space<vmem>>, vector<1x4x16xf32>
    %46 = vector.shape_cast %45 : vector<1x4x16xf32> to vector<4x16xf32>
    %c0_53 = arith.constant 0 : index
    %c91 = arith.constant 91 : index
    %47 = vector.load %arg4[%c0_53, %c91] : memref<4x324xf32, #tpu.memory_space<vmem>>, vector<4x16xf32>
    tpu.vector_store %arg4[%c0_53, %c91], %46 {strides = array<i32>} : memref<4x324xf32, #tpu.memory_space<vmem>>, vector<4x16xf32>,
    %c0_54 = arith.constant 0 : index
    %c0_55 = arith.constant 0 : index
    %c65 = arith.constant 65 : index
    %48 = vector.load %arg1[%c0_54, %c0_55, %c65] : memref<1x4x256xf32, #tpu.memory_space<vmem>>, vector<1x4x1xf32>
    %49 = vector.shape_cast %48 : vector<1x4x1xf32> to vector<4x1xf32>
    %c0_56 = arith.constant 0 : index
    %c90 = arith.constant 90 : index
    %50 = vector.load %arg4[%c0_56, %c90] : memref<4x324xf32, #tpu.memory_space<vmem>>, vector<4x1xf32>
    tpu.vector_store %arg4[%c0_56, %c90], %49 {strides = array<i32>} : memref<4x324xf32, #tpu.memory_space<vmem>>, vector<4x1xf32>,
    %c0_57 = arith.constant 0 : index
    %c0_58 = arith.constant 0 : index
    %c78 = arith.constant 78 : index
    %51 = vector.load %arg1[%c0_57, %c0_58, %c78] : memref<1x4x256xf32, #tpu.memory_space<vmem>>, vector<1x4x1xf32>
    %52 = vector.shape_cast %51 : vector<1x4x1xf32> to vector<4x1xf32>
    %c0_59 = arith.constant 0 : index
    %c107 = arith.constant 107 : index
    %53 = vector.load %arg4[%c0_59, %c107] : memref<4x324xf32, #tpu.memory_space<vmem>>, vector<4x1xf32>
    tpu.vector_store %arg4[%c0_59, %c107], %52 {strides = array<i32>} : memref<4x324xf32, #tpu.memory_space<vmem>>, vector<4x1xf32>,
    %c0_60 = arith.constant 0 : index
    %c0_61 = arith.constant 0 : index
    %c80 = arith.constant 80 : index
    %54 = vector.load %arg1[%c0_60, %c0_61, %c80] : memref<1x4x256xf32, #tpu.memory_space<vmem>>, vector<1x4x16xf32>
    %55 = vector.shape_cast %54 : vector<1x4x16xf32> to vector<4x16xf32>
    %c0_62 = arith.constant 0 : index
    %c109 = arith.constant 109 : index
    %56 = vector.load %arg4[%c0_62, %c109] : memref<4x324xf32, #tpu.memory_space<vmem>>, vector<4x16xf32>
    tpu.vector_store %arg4[%c0_62, %c109], %55 {strides = array<i32>} : memref<4x324xf32, #tpu.memory_space<vmem>>, vector<4x16xf32>,
    %c0_63 = arith.constant 0 : index
    %c0_64 = arith.constant 0 : index
    %c81 = arith.constant 81 : index
    %57 = vector.load %arg1[%c0_63, %c0_64, %c81] : memref<1x4x256xf32, #tpu.memory_space<vmem>>, vector<1x4x1xf32>
    %58 = vector.shape_cast %57 : vector<1x4x1xf32> to vector<4x1xf32>
    %c0_65 = arith.constant 0 : index
    %c108 = arith.constant 108 : index
    %59 = vector.load %arg4[%c0_65, %c108] : memref<4x324xf32, #tpu.memory_space<vmem>>, vector<4x1xf32>
    tpu.vector_store %arg4[%c0_65, %c108], %58 {strides = array<i32>} : memref<4x324xf32, #tpu.memory_space<vmem>>, vector<4x1xf32>,
    %c0_66 = arith.constant 0 : index
    %c0_67 = arith.constant 0 : index
    %c94 = arith.constant 94 : index
    %60 = vector.load %arg1[%c0_66, %c0_67, %c94] : memref<1x4x256xf32, #tpu.memory_space<vmem>>, vector<1x4x1xf32>
    %61 = vector.shape_cast %60 : vector<1x4x1xf32> to vector<4x1xf32>
    %c0_68 = arith.constant 0 : index
    %c125 = arith.constant 125 : index
    %62 = vector.load %arg4[%c0_68, %c125] : memref<4x324xf32, #tpu.memory_space<vmem>>, vector<4x1xf32>
    tpu.vector_store %arg4[%c0_68, %c125], %61 {strides = array<i32>} : memref<4x324xf32, #tpu.memory_space<vmem>>, vector<4x1xf32>,
    %c0_69 = arith.constant 0 : index
    %c0_70 = arith.constant 0 : index
    %c96 = arith.constant 96 : index
    %63 = vector.load %arg1[%c0_69, %c0_70, %c96] : memref<1x4x256xf32, #tpu.memory_space<vmem>>, vector<1x4x16xf32>
    %64 = vector.shape_cast %63 : vector<1x4x16xf32> to vector<4x16xf32>
    %c0_71 = arith.constant 0 : index
    %c127 = arith.constant 127 : index
    %65 = vector.load %arg4[%c0_71, %c127] : memref<4x324xf32, #tpu.memory_space<vmem>>, vector<4x16xf32>
    tpu.vector_store %arg4[%c0_71, %c127], %64 {strides = array<i32>} : memref<4x324xf32, #tpu.memory_space<vmem>>, vector<4x16xf32>,
    %c0_72 = arith.constant 0 : index
    %c0_73 = arith.constant 0 : index
    %c97 = arith.constant 97 : index
    %66 = vector.load %arg1[%c0_72, %c0_73, %c97] : memref<1x4x256xf32, #tpu.memory_space<vmem>>, vector<1x4x1xf32>
    %67 = vector.shape_cast %66 : vector<1x4x1xf32> to vector<4x1xf32>
    %c0_74 = arith.constant 0 : index
    %c126 = arith.constant 126 : index
    %68 = vector.load %arg4[%c0_74, %c126] : memref<4x324xf32, #tpu.memory_space<vmem>>, vector<4x1xf32>
    tpu.vector_store %arg4[%c0_74, %c126], %67 {strides = array<i32>} : memref<4x324xf32, #tpu.memory_space<vmem>>, vector<4x1xf32>,
    %c0_75 = arith.constant 0 : index
    %c0_76 = arith.constant 0 : index
    %c110 = arith.constant 110 : index
    %69 = vector.load %arg1[%c0_75, %c0_76, %c110] : memref<1x4x256xf32, #tpu.memory_space<vmem>>, vector<1x4x1xf32>
    %70 = vector.shape_cast %69 : vector<1x4x1xf32> to vector<4x1xf32>
    %c0_77 = arith.constant 0 : index
    %c143 = arith.constant 143 : index
    %71 = vector.load %arg4[%c0_77, %c143] : memref<4x324xf32, #tpu.memory_space<vmem>>, vector<4x1xf32>
    tpu.vector_store %arg4[%c0_77, %c143], %70 {strides = array<i32>} : memref<4x324xf32, #tpu.memory_space<vmem>>, vector<4x1xf32>,
    %c0_78 = arith.constant 0 : index
    %c0_79 = arith.constant 0 : index
    %c112 = arith.constant 112 : index
    %72 = vector.load %arg1[%c0_78, %c0_79, %c112] : memref<1x4x256xf32, #tpu.memory_space<vmem>>, vector<1x4x16xf32>
    %73 = vector.shape_cast %72 : vector<1x4x16xf32> to vector<4x16xf32>
    %c0_80 = arith.constant 0 : index
    %c145 = arith.constant 145 : index
    %74 = vector.load %arg4[%c0_80, %c145] : memref<4x324xf32, #tpu.memory_space<vmem>>, vector<4x16xf32>
    tpu.vector_store %arg4[%c0_80, %c145], %73 {strides = array<i32>} : memref<4x324xf32, #tpu.memory_space<vmem>>, vector<4x16xf32>,
    %c0_81 = arith.constant 0 : index
    %c0_82 = arith.constant 0 : index
    %c113 = arith.constant 113 : index
    %75 = vector.load %arg1[%c0_81, %c0_82, %c113] : memref<1x4x256xf32, #tpu.memory_space<vmem>>, vector<1x4x1xf32>
    %76 = vector.shape_cast %75 : vector<1x4x1xf32> to vector<4x1xf32>
    %c0_83 = arith.constant 0 : index
    %c144 = arith.constant 144 : index
    %77 = vector.load %arg4[%c0_83, %c144] : memref<4x324xf32, #tpu.memory_space<vmem>>, vector<4x1xf32>
    tpu.vector_store %arg4[%c0_83, %c144], %76 {strides = array<i32>} : memref<4x324xf32, #tpu.memory_space<vmem>>, vector<4x1xf32>,
    %c0_84 = arith.constant 0 : index
    %c0_85 = arith.constant 0 : index
    %c126_86 = arith.constant 126 : index
    %78 = vector.load %arg1[%c0_84, %c0_85, %c126_86] : memref<1x4x256xf32, #tpu.memory_space<vmem>>, vector<1x4x1xf32>
    %79 = vector.shape_cast %78 : vector<1x4x1xf32> to vector<4x1xf32>
    %c0_87 = arith.constant 0 : index
    %c161 = arith.constant 161 : index
    %80 = vector.load %arg4[%c0_87, %c161] : memref<4x324xf32, #tpu.memory_space<vmem>>, vector<4x1xf32>
    tpu.vector_store %arg4[%c0_87, %c161], %79 {strides = array<i32>} : memref<4x324xf32, #tpu.memory_space<vmem>>, vector<4x1xf32>,
    %c0_88 = arith.constant 0 : index
    %c0_89 = arith.constant 0 : index
    %c128 = arith.constant 128 : index
    %81 = vector.load %arg1[%c0_88, %c0_89, %c128] : memref<1x4x256xf32, #tpu.memory_space<vmem>>, vector<1x4x16xf32>
    %82 = vector.shape_cast %81 : vector<1x4x16xf32> to vector<4x16xf32>
    %c0_90 = arith.constant 0 : index
    %c163 = arith.constant 163 : index
    %83 = vector.load %arg4[%c0_90, %c163] : memref<4x324xf32, #tpu.memory_space<vmem>>, vector<4x16xf32>
    tpu.vector_store %arg4[%c0_90, %c163], %82 {strides = array<i32>} : memref<4x324xf32, #tpu.memory_space<vmem>>, vector<4x16xf32>,
    %c0_91 = arith.constant 0 : index
    %c0_92 = arith.constant 0 : index
    %c129 = arith.constant 129 : index
    %84 = vector.load %arg1[%c0_91, %c0_92, %c129] : memref<1x4x256xf32, #tpu.memory_space<vmem>>, vector<1x4x1xf32>
    %85 = vector.shape_cast %84 : vector<1x4x1xf32> to vector<4x1xf32>
    %c0_93 = arith.constant 0 : index
    %c162 = arith.constant 162 : index
    %86 = vector.load %arg4[%c0_93, %c162] : memref<4x324xf32, #tpu.memory_space<vmem>>, vector<4x1xf32>
    tpu.vector_store %arg4[%c0_93, %c162], %85 {strides = array<i32>} : memref<4x324xf32, #tpu.memory_space<vmem>>, vector<4x1xf32>,
    %c0_94 = arith.constant 0 : index
    %c0_95 = arith.constant 0 : index
    %c142 = arith.constant 142 : index
    %87 = vector.load %arg1[%c0_94, %c0_95, %c142] : memref<1x4x256xf32, #tpu.memory_space<vmem>>, vector<1x4x1xf32>
    %88 = vector.shape_cast %87 : vector<1x4x1xf32> to vector<4x1xf32>
    %c0_96 = arith.constant 0 : index
    %c179 = arith.constant 179 : index
    %89 = vector.load %arg4[%c0_96, %c179] : memref<4x324xf32, #tpu.memory_space<vmem>>, vector<4x1xf32>
    tpu.vector_store %arg4[%c0_96, %c179], %88 {strides = array<i32>} : memref<4x324xf32, #tpu.memory_space<vmem>>, vector<4x1xf32>,
    %c0_97 = arith.constant 0 : index
    %c0_98 = arith.constant 0 : index
    %c144_99 = arith.constant 144 : index
    %90 = vector.load %arg1[%c0_97, %c0_98, %c144_99] : memref<1x4x256xf32, #tpu.memory_space<vmem>>, vector<1x4x16xf32>
    %91 = vector.shape_cast %90 : vector<1x4x16xf32> to vector<4x16xf32>
    %c0_100 = arith.constant 0 : index
    %c181 = arith.constant 181 : index
    %92 = vector.load %arg4[%c0_100, %c181] : memref<4x324xf32, #tpu.memory_space<vmem>>, vector<4x16xf32>
    tpu.vector_store %arg4[%c0_100, %c181], %91 {strides = array<i32>} : memref<4x324xf32, #tpu.memory_space<vmem>>, vector<4x16xf32>,
    %c0_101 = arith.constant 0 : index
    %c0_102 = arith.constant 0 : index
    %c145_103 = arith.constant 145 : index
    %93 = vector.load %arg1[%c0_101, %c0_102, %c145_103] : memref<1x4x256xf32, #tpu.memory_space<vmem>>, vector<1x4x1xf32>
    %94 = vector.shape_cast %93 : vector<1x4x1xf32> to vector<4x1xf32>
    %c0_104 = arith.constant 0 : index
    %c180 = arith.constant 180 : index
    %95 = vector.load %arg4[%c0_104, %c180] : memref<4x324xf32, #tpu.memory_space<vmem>>, vector<4x1xf32>
    tpu.vector_store %arg4[%c0_104, %c180], %94 {strides = array<i32>} : memref<4x324xf32, #tpu.memory_space<vmem>>, vector<4x1xf32>,
    %c0_105 = arith.constant 0 : index
    %c0_106 = arith.constant 0 : index
    %c158 = arith.constant 158 : index
    %96 = vector.load %arg1[%c0_105, %c0_106, %c158] : memref<1x4x256xf32, #tpu.memory_space<vmem>>, vector<1x4x1xf32>
    %97 = vector.shape_cast %96 : vector<1x4x1xf32> to vector<4x1xf32>
    %c0_107 = arith.constant 0 : index
    %c197 = arith.constant 197 : index
    %98 = vector.load %arg4[%c0_107, %c197] : memref<4x324xf32, #tpu.memory_space<vmem>>, vector<4x1xf32>
    tpu.vector_store %arg4[%c0_107, %c197], %97 {strides = array<i32>} : memref<4x324xf32, #tpu.memory_space<vmem>>, vector<4x1xf32>,
    %c0_108 = arith.constant 0 : index
    %c0_109 = arith.constant 0 : index
    %c160 = arith.constant 160 : index
    %99 = vector.load %arg1[%c0_108, %c0_109, %c160] : memref<1x4x256xf32, #tpu.memory_space<vmem>>, vector<1x4x16xf32>
    %100 = vector.shape_cast %99 : vector<1x4x16xf32> to vector<4x16xf32>
    %c0_110 = arith.constant 0 : index
    %c199 = arith.constant 199 : index
    %101 = vector.load %arg4[%c0_110, %c199] : memref<4x324xf32, #tpu.memory_space<vmem>>, vector<4x16xf32>
    tpu.vector_store %arg4[%c0_110, %c199], %100 {strides = array<i32>} : memref<4x324xf32, #tpu.memory_space<vmem>>, vector<4x16xf32>,
    %c0_111 = arith.constant 0 : index
    %c0_112 = arith.constant 0 : index
    %c161_113 = arith.constant 161 : index
    %102 = vector.load %arg1[%c0_111, %c0_112, %c161_113] : memref<1x4x256xf32, #tpu.memory_space<vmem>>, vector<1x4x1xf32>
    %103 = vector.shape_cast %102 : vector<1x4x1xf32> to vector<4x1xf32>
    %c0_114 = arith.constant 0 : index
    %c198 = arith.constant 198 : index
    %104 = vector.load %arg4[%c0_114, %c198] : memref<4x324xf32, #tpu.memory_space<vmem>>, vector<4x1xf32>
    tpu.vector_store %arg4[%c0_114, %c198], %103 {strides = array<i32>} : memref<4x324xf32, #tpu.memory_space<vmem>>, vector<4x1xf32>,
    %c0_115 = arith.constant 0 : index
    %c0_116 = arith.constant 0 : index
    %c174 = arith.constant 174 : index
    %105 = vector.load %arg1[%c0_115, %c0_116, %c174] : memref<1x4x256xf32, #tpu.memory_space<vmem>>, vector<1x4x1xf32>
    %106 = vector.shape_cast %105 : vector<1x4x1xf32> to vector<4x1xf32>
    %c0_117 = arith.constant 0 : index
    %c215 = arith.constant 215 : index
    %107 = vector.load %arg4[%c0_117, %c215] : memref<4x324xf32, #tpu.memory_space<vmem>>, vector<4x1xf32>
    tpu.vector_store %arg4[%c0_117, %c215], %106 {strides = array<i32>} : memref<4x324xf32, #tpu.memory_space<vmem>>, vector<4x1xf32>,
    %c0_118 = arith.constant 0 : index
    %c0_119 = arith.constant 0 : index
    %c176 = arith.constant 176 : index
    %108 = vector.load %arg1[%c0_118, %c0_119, %c176] : memref<1x4x256xf32, #tpu.memory_space<vmem>>, vector<1x4x16xf32>
    %109 = vector.shape_cast %108 : vector<1x4x16xf32> to vector<4x16xf32>
    %c0_120 = arith.constant 0 : index
    %c217 = arith.constant 217 : index
    %110 = vector.load %arg4[%c0_120, %c217] : memref<4x324xf32, #tpu.memory_space<vmem>>, vector<4x16xf32>
    tpu.vector_store %arg4[%c0_120, %c217], %109 {strides = array<i32>} : memref<4x324xf32, #tpu.memory_space<vmem>>, vector<4x16xf32>,
    %c0_121 = arith.constant 0 : index
    %c0_122 = arith.constant 0 : index
    %c177 = arith.constant 177 : index
    %111 = vector.load %arg1[%c0_121, %c0_122, %c177] : memref<1x4x256xf32, #tpu.memory_space<vmem>>, vector<1x4x1xf32>
    %112 = vector.shape_cast %111 : vector<1x4x1xf32> to vector<4x1xf32>
    %c0_123 = arith.constant 0 : index
    %c216 = arith.constant 216 : index
    %113 = vector.load %arg4[%c0_123, %c216] : memref<4x324xf32, #tpu.memory_space<vmem>>, vector<4x1xf32>
    tpu.vector_store %arg4[%c0_123, %c216], %112 {strides = array<i32>} : memref<4x324xf32, #tpu.memory_space<vmem>>, vector<4x1xf32>,
    %c0_124 = arith.constant 0 : index
    %c0_125 = arith.constant 0 : index
    %c190 = arith.constant 190 : index
    %114 = vector.load %arg1[%c0_124, %c0_125, %c190] : memref<1x4x256xf32, #tpu.memory_space<vmem>>, vector<1x4x1xf32>
    %115 = vector.shape_cast %114 : vector<1x4x1xf32> to vector<4x1xf32>
    %c0_126 = arith.constant 0 : index
    %c233 = arith.constant 233 : index
    %116 = vector.load %arg4[%c0_126, %c233] : memref<4x324xf32, #tpu.memory_space<vmem>>, vector<4x1xf32>
    tpu.vector_store %arg4[%c0_126, %c233], %115 {strides = array<i32>} : memref<4x324xf32, #tpu.memory_space<vmem>>, vector<4x1xf32>,
    %c0_127 = arith.constant 0 : index
    %c0_128 = arith.constant 0 : index
    %c192 = arith.constant 192 : index
    %117 = vector.load %arg1[%c0_127, %c0_128, %c192] : memref<1x4x256xf32, #tpu.memory_space<vmem>>, vector<1x4x16xf32>
    %118 = vector.shape_cast %117 : vector<1x4x16xf32> to vector<4x16xf32>
    %c0_129 = arith.constant 0 : index
    %c235 = arith.constant 235 : index
    %119 = vector.load %arg4[%c0_129, %c235] : memref<4x324xf32, #tpu.memory_space<vmem>>, vector<4x16xf32>
    tpu.vector_store %arg4[%c0_129, %c235], %118 {strides = array<i32>} : memref<4x324xf32, #tpu.memory_space<vmem>>, vector<4x16xf32>,
    %c0_130 = arith.constant 0 : index
    %c0_131 = arith.constant 0 : index
    %c193 = arith.constant 193 : index
    %120 = vector.load %arg1[%c0_130, %c0_131, %c193] : memref<1x4x256xf32, #tpu.memory_space<vmem>>, vector<1x4x1xf32>
    %121 = vector.shape_cast %120 : vector<1x4x1xf32> to vector<4x1xf32>
    %c0_132 = arith.constant 0 : index
    %c234 = arith.constant 234 : index
    %122 = vector.load %arg4[%c0_132, %c234] : memref<4x324xf32, #tpu.memory_space<vmem>>, vector<4x1xf32>
    tpu.vector_store %arg4[%c0_132, %c234], %121 {strides = array<i32>} : memref<4x324xf32, #tpu.memory_space<vmem>>, vector<4x1xf32>,
    %c0_133 = arith.constant 0 : index
    %c0_134 = arith.constant 0 : index
    %c206 = arith.constant 206 : index
    %123 = vector.load %arg1[%c0_133, %c0_134, %c206] : memref<1x4x256xf32, #tpu.memory_space<vmem>>, vector<1x4x1xf32>
    %124 = vector.shape_cast %123 : vector<1x4x1xf32> to vector<4x1xf32>
    %c0_135 = arith.constant 0 : index
    %c251 = arith.constant 251 : index
    %125 = vector.load %arg4[%c0_135, %c251] : memref<4x324xf32, #tpu.memory_space<vmem>>, vector<4x1xf32>
    tpu.vector_store %arg4[%c0_135, %c251], %124 {strides = array<i32>} : memref<4x324xf32, #tpu.memory_space<vmem>>, vector<4x1xf32>,
    %c0_136 = arith.constant 0 : index
    %c0_137 = arith.constant 0 : index
    %c208 = arith.constant 208 : index
    %126 = vector.load %arg1[%c0_136, %c0_137, %c208] : memref<1x4x256xf32, #tpu.memory_space<vmem>>, vector<1x4x16xf32>
    %127 = vector.shape_cast %126 : vector<1x4x16xf32> to vector<4x16xf32>
    %c0_138 = arith.constant 0 : index
    %c253 = arith.constant 253 : index
    %128 = vector.load %arg4[%c0_138, %c253] : memref<4x324xf32, #tpu.memory_space<vmem>>, vector<4x16xf32>
    tpu.vector_store %arg4[%c0_138, %c253], %127 {strides = array<i32>} : memref<4x324xf32, #tpu.memory_space<vmem>>, vector<4x16xf32>,
    %c0_139 = arith.constant 0 : index
    %c0_140 = arith.constant 0 : index
    %c209 = arith.constant 209 : index
    %129 = vector.load %arg1[%c0_139, %c0_140, %c209] : memref<1x4x256xf32, #tpu.memory_space<vmem>>, vector<1x4x1xf32>
    %130 = vector.shape_cast %129 : vector<1x4x1xf32> to vector<4x1xf32>
    %c0_141 = arith.constant 0 : index
    %c252 = arith.constant 252 : index
    %131 = vector.load %arg4[%c0_141, %c252] : memref<4x324xf32, #tpu.memory_space<vmem>>, vector<4x1xf32>
    tpu.vector_store %arg4[%c0_141, %c252], %130 {strides = array<i32>} : memref<4x324xf32, #tpu.memory_space<vmem>>, vector<4x1xf32>,
    %c0_142 = arith.constant 0 : index
    %c0_143 = arith.constant 0 : index
    %c222 = arith.constant 222 : index
    %132 = vector.load %arg1[%c0_142, %c0_143, %c222] : memref<1x4x256xf32, #tpu.memory_space<vmem>>, vector<1x4x1xf32>
    %133 = vector.shape_cast %132 : vector<1x4x1xf32> to vector<4x1xf32>
    %c0_144 = arith.constant 0 : index
    %c269 = arith.constant 269 : index
    %134 = vector.load %arg4[%c0_144, %c269] : memref<4x324xf32, #tpu.memory_space<vmem>>, vector<4x1xf32>
    tpu.vector_store %arg4[%c0_144, %c269], %133 {strides = array<i32>} : memref<4x324xf32, #tpu.memory_space<vmem>>, vector<4x1xf32>,
    %c0_145 = arith.constant 0 : index
    %c0_146 = arith.constant 0 : index
    %c224 = arith.constant 224 : index
    %135 = vector.load %arg1[%c0_145, %c0_146, %c224] : memref<1x4x256xf32, #tpu.memory_space<vmem>>, vector<1x4x16xf32>
    %136 = vector.shape_cast %135 : vector<1x4x16xf32> to vector<4x16xf32>
    %c0_147 = arith.constant 0 : index
    %c271 = arith.constant 271 : index
    %137 = vector.load %arg4[%c0_147, %c271] : memref<4x324xf32, #tpu.memory_space<vmem>>, vector<4x16xf32>
    tpu.vector_store %arg4[%c0_147, %c271], %136 {strides = array<i32>} : memref<4x324xf32, #tpu.memory_space<vmem>>, vector<4x16xf32>,
    %c0_148 = arith.constant 0 : index
    %c0_149 = arith.constant 0 : index
    %c225 = arith.constant 225 : index
    %138 = vector.load %arg1[%c0_148, %c0_149, %c225] : memref<1x4x256xf32, #tpu.memory_space<vmem>>, vector<1x4x1xf32>
    %139 = vector.shape_cast %138 : vector<1x4x1xf32> to vector<4x1xf32>
    %c0_150 = arith.constant 0 : index
    %c270 = arith.constant 270 : index
    %140 = vector.load %arg4[%c0_150, %c270] : memref<4x324xf32, #tpu.memory_space<vmem>>, vector<4x1xf32>
    tpu.vector_store %arg4[%c0_150, %c270], %139 {strides = array<i32>} : memref<4x324xf32, #tpu.memory_space<vmem>>, vector<4x1xf32>,
    %c0_151 = arith.constant 0 : index
    %c0_152 = arith.constant 0 : index
    %c238 = arith.constant 238 : index
    %141 = vector.load %arg1[%c0_151, %c0_152, %c238] : memref<1x4x256xf32, #tpu.memory_space<vmem>>, vector<1x4x1xf32>
    %142 = vector.shape_cast %141 : vector<1x4x1xf32> to vector<4x1xf32>
    %c0_153 = arith.constant 0 : index
    %c287 = arith.constant 287 : index
    %143 = vector.load %arg4[%c0_153, %c287] : memref<4x324xf32, #tpu.memory_space<vmem>>, vector<4x1xf32>
    tpu.vector_store %arg4[%c0_153, %c287], %142 {strides = array<i32>} : memref<4x324xf32, #tpu.memory_space<vmem>>, vector<4x1xf32>,
    %c0_154 = arith.constant 0 : index
    %c0_155 = arith.constant 0 : index
    %c240 = arith.constant 240 : index
    %144 = vector.load %arg1[%c0_154, %c0_155, %c240] : memref<1x4x256xf32, #tpu.memory_space<vmem>>, vector<1x4x16xf32>
    %145 = vector.shape_cast %144 : vector<1x4x16xf32> to vector<4x16xf32>
    %c0_156 = arith.constant 0 : index
    %c289 = arith.constant 289 : index
    %146 = vector.load %arg4[%c0_156, %c289] : memref<4x324xf32, #tpu.memory_space<vmem>>, vector<4x16xf32>
    tpu.vector_store %arg4[%c0_156, %c289], %145 {strides = array<i32>} : memref<4x324xf32, #tpu.memory_space<vmem>>, vector<4x16xf32>,
    %c0_157 = arith.constant 0 : index
    %c0_158 = arith.constant 0 : index
    %c241 = arith.constant 241 : index
    %147 = vector.load %arg1[%c0_157, %c0_158, %c241] : memref<1x4x256xf32, #tpu.memory_space<vmem>>, vector<1x4x1xf32>
    %148 = vector.shape_cast %147 : vector<1x4x1xf32> to vector<4x1xf32>
    %c0_159 = arith.constant 0 : index
    %c288 = arith.constant 288 : index
    %149 = vector.load %arg4[%c0_159, %c288] : memref<4x324xf32, #tpu.memory_space<vmem>>, vector<4x1xf32>
    tpu.vector_store %arg4[%c0_159, %c288], %148 {strides = array<i32>} : memref<4x324xf32, #tpu.memory_space<vmem>>, vector<4x1xf32>,
    %c0_160 = arith.constant 0 : index
    %c0_161 = arith.constant 0 : index
    %c254 = arith.constant 254 : index
    %150 = vector.load %arg1[%c0_160, %c0_161, %c254] : memref<1x4x256xf32, #tpu.memory_space<vmem>>, vector<1x4x1xf32>
    %151 = vector.shape_cast %150 : vector<1x4x1xf32> to vector<4x1xf32>
    %c0_162 = arith.constant 0 : index
    %c305 = arith.constant 305 : index
    %152 = vector.load %arg4[%c0_162, %c305] : memref<4x324xf32, #tpu.memory_space<vmem>>, vector<4x1xf32>
    tpu.vector_store %arg4[%c0_162, %c305], %151 {strides = array<i32>} : memref<4x324xf32, #tpu.memory_space<vmem>>, vector<4x1xf32>,
    %c0_163 = arith.constant 0 : index
    %c0_164 = arith.constant 0 : index
    %c224_165 = arith.constant 224 : index
    %153 = vector.load %arg1[%c0_163, %c0_164, %c224_165] : memref<1x4x256xf32, #tpu.memory_space<vmem>>, vector<1x4x16xf32>
    %154 = vector.shape_cast %153 : vector<1x4x16xf32> to vector<4x16xf32>
    %c0_166 = arith.constant 0 : index
    %c307 = arith.constant 307 : index
    %155 = vector.load %arg4[%c0_166, %c307] : memref<4x324xf32, #tpu.memory_space<vmem>>, vector<4x16xf32>
    tpu.vector_store %arg4[%c0_166, %c307], %154 {strides = array<i32>} : memref<4x324xf32, #tpu.memory_space<vmem>>, vector<4x16xf32>,
    %c0_167 = arith.constant 0 : index
    %c0_168 = arith.constant 0 : index
    %c225_169 = arith.constant 225 : index
    %156 = vector.load %arg1[%c0_167, %c0_168, %c225_169] : memref<1x4x256xf32, #tpu.memory_space<vmem>>, vector<1x4x1xf32>
    %157 = vector.shape_cast %156 : vector<1x4x1xf32> to vector<4x1xf32>
    %c0_170 = arith.constant 0 : index
    %c306 = arith.constant 306 : index
    %158 = vector.load %arg4[%c0_170, %c306] : memref<4x324xf32, #tpu.memory_space<vmem>>, vector<4x1xf32>
    tpu.vector_store %arg4[%c0_170, %c306], %157 {strides = array<i32>} : memref<4x324xf32, #tpu.memory_space<vmem>>, vector<4x1xf32>,
    %c0_171 = arith.constant 0 : index
    %c0_172 = arith.constant 0 : index
    %c238_173 = arith.constant 238 : index
    %159 = vector.load %arg1[%c0_171, %c0_172, %c238_173] : memref<1x4x256xf32, #tpu.memory_space<vmem>>, vector<1x4x1xf32>
    %160 = vector.shape_cast %159 : vector<1x4x1xf32> to vector<4x1xf32>
    %c0_174 = arith.constant 0 : index
    %c323 = arith.constant 323 : index
    %161 = vector.load %arg4[%c0_174, %c323] : memref<4x324xf32, #tpu.memory_space<vmem>>, vector<4x1xf32>
    tpu.vector_store %arg4[%c0_174, %c323], %160 {strides = array<i32>} : memref<4x324xf32, #tpu.memory_space<vmem>>, vector<4x1xf32>,
    %c0_175 = arith.constant 0 : index
    %c0_176 = arith.constant 0 : index
    %162 = vector.load %arg4[%c0_175, %c0_176] : memref<4x324xf32, #tpu.memory_space<vmem>>, vector<4x286xf32>
    %c0_177 = arith.constant 0 : index
    %c0_178 = arith.constant 0 : index
    %163 = vector.load %arg5[%c0_177, %c0_178] : memref<37x286xf32, #tpu.memory_space<vmem>>, vector<4x286xf32>
    tpu.vector_store %arg5[%c0_177, %c0_178], %162 {strides = array<i32>} : memref<37x286xf32, #tpu.memory_space<vmem>>, vector<4x286xf32>,
    %c0_179 = arith.constant 0 : index
    %c1_180 = arith.constant 1 : index
    %164 = vector.load %arg4[%c0_179, %c1_180] : memref<4x324xf32, #tpu.memory_space<vmem>>, vector<4x286xf32>
    %c4 = arith.constant 4 : index
    %c0_181 = arith.constant 0 : index
    %165 = vector.load %arg5[%c4, %c0_181] : memref<37x286xf32, #tpu.memory_space<vmem>>, vector<4x286xf32>
    tpu.vector_store %arg5[%c4, %c0_181], %164 {strides = array<i32>} : memref<37x286xf32, #tpu.memory_space<vmem>>, vector<4x286xf32>,
    %c0_182 = arith.constant 0 : index
    %c2 = arith.constant 2 : index
    %166 = vector.load %arg4[%c0_182, %c2] : memref<4x324xf32, #tpu.memory_space<vmem>>, vector<4x286xf32>
    %c8 = arith.constant 8 : index
    %c0_183 = arith.constant 0 : index
    %167 = vector.load %arg5[%c8, %c0_183] : memref<37x286xf32, #tpu.memory_space<vmem>>, vector<4x286xf32>
    tpu.vector_store %arg5[%c8, %c0_183], %166 {strides = array<i32>} : memref<37x286xf32, #tpu.memory_space<vmem>>, vector<4x286xf32>,
    %c0_184 = arith.constant 0 : index
    %c18_185 = arith.constant 18 : index
    %168 = vector.load %arg4[%c0_184, %c18_185] : memref<4x324xf32, #tpu.memory_space<vmem>>, vector<4x286xf32>
    %c12 = arith.constant 12 : index
    %c0_186 = arith.constant 0 : index
    %169 = vector.load %arg5[%c12, %c0_186] : memref<37x286xf32, #tpu.memory_space<vmem>>, vector<4x286xf32>
    tpu.vector_store %arg5[%c12, %c0_186], %168 {strides = array<i32>} : memref<37x286xf32, #tpu.memory_space<vmem>>, vector<4x286xf32>,
    %c0_187 = arith.constant 0 : index
    %c19_188 = arith.constant 19 : index
    %170 = vector.load %arg4[%c0_187, %c19_188] : memref<4x324xf32, #tpu.memory_space<vmem>>, vector<4x286xf32>
    %c16_189 = arith.constant 16 : index
    %c0_190 = arith.constant 0 : index
    %171 = vector.load %arg5[%c16_189, %c0_190] : memref<37x286xf32, #tpu.memory_space<vmem>>, vector<4x286xf32>
    tpu.vector_store %arg5[%c16_189, %c0_190], %170 {strides = array<i32>} : memref<37x286xf32, #tpu.memory_space<vmem>>, vector<4x286xf32>,
    %c0_191 = arith.constant 0 : index
    %c20 = arith.constant 20 : index
    %172 = vector.load %arg4[%c0_191, %c20] : memref<4x324xf32, #tpu.memory_space<vmem>>, vector<4x286xf32>
    %c20_192 = arith.constant 20 : index
    %c0_193 = arith.constant 0 : index
    %173 = vector.load %arg5[%c20_192, %c0_193] : memref<37x286xf32, #tpu.memory_space<vmem>>, vector<4x286xf32>
    tpu.vector_store %arg5[%c20_192, %c0_193], %172 {strides = array<i32>} : memref<37x286xf32, #tpu.memory_space<vmem>>, vector<4x286xf32>,
    %c0_194 = arith.constant 0 : index
    %c36_195 = arith.constant 36 : index
    %174 = vector.load %arg4[%c0_194, %c36_195] : memref<4x324xf32, #tpu.memory_space<vmem>>, vector<4x286xf32>
    %c24 = arith.constant 24 : index
    %c0_196 = arith.constant 0 : index
    %175 = vector.load %arg5[%c24, %c0_196] : memref<37x286xf32, #tpu.memory_space<vmem>>, vector<4x286xf32>
    tpu.vector_store %arg5[%c24, %c0_196], %174 {strides = array<i32>} : memref<37x286xf32, #tpu.memory_space<vmem>>, vector<4x286xf32>,
    %c0_197 = arith.constant 0 : index
    %c37_198 = arith.constant 37 : index
    %176 = vector.load %arg4[%c0_197, %c37_198] : memref<4x324xf32, #tpu.memory_space<vmem>>, vector<4x286xf32>
    %c28 = arith.constant 28 : index
    %c0_199 = arith.constant 0 : index
    %177 = vector.load %arg5[%c28, %c0_199] : memref<37x286xf32, #tpu.memory_space<vmem>>, vector<4x286xf32>
    tpu.vector_store %arg5[%c28, %c0_199], %176 {strides = array<i32>} : memref<37x286xf32, #tpu.memory_space<vmem>>, vector<4x286xf32>,
    %c0_200 = arith.constant 0 : index
    %c38 = arith.constant 38 : index
    %178 = vector.load %arg4[%c0_200, %c38] : memref<4x324xf32, #tpu.memory_space<vmem>>, vector<4x286xf32>
    %c32_201 = arith.constant 32 : index
    %c0_202 = arith.constant 0 : index
    %179 = vector.load %arg5[%c32_201, %c0_202] : memref<37x286xf32, #tpu.memory_space<vmem>>, vector<4x286xf32>
    tpu.vector_store %arg5[%c32_201, %c0_202], %178 {strides = array<i32>} : memref<37x286xf32, #tpu.memory_space<vmem>>, vector<4x286xf32>,
    %cst = arith.constant 1.000000e+00 : f32
    %180 = vector.broadcast %cst : f32 to vector<1x286xf32>
    %c36_203 = arith.constant 36 : index
    %c0_204 = arith.constant 0 : index
    %181 = vector.load %arg5[%c36_203, %c0_204] : memref<37x286xf32, #tpu.memory_space<vmem>>, vector<1x286xf32>
    tpu.vector_store %arg5[%c36_203, %c0_204], %180 {strides = array<i32>} : memref<37x286xf32, #tpu.memory_space<vmem>>, vector<1x286xf32>,
    %c0_205 = arith.constant 0 : index
    %c0_206 = arith.constant 0 : index
    %182 = vector.load %arg2[%c0_205, %c0_206] : memref<8x37xf32, #tpu.memory_space<vmem>>, vector<8x37xf32>
    %c0_207 = arith.constant 0 : index
    %c0_208 = arith.constant 0 : index
    %183 = vector.load %arg5[%c0_207, %c0_208] : memref<37x286xf32, #tpu.memory_space<vmem>>, vector<37x286xf32>
    %cst_209 = arith.constant dense<0.000000e+00> : vector<8x286xf32>
    %184 = tpu.matmul %182, %183, %cst_209 {dimension_numbers = #tpu.dot_dimension_numbers<[1], [0], [0], [1], [0, 0, 1, 1], [], []>} : vector<8x37xf32>, vector<37x286xf32>, vector<8x286xf32> -> vector<8x286xf32>
    %c0_210 = arith.constant 0 : index
    %c0_211 = arith.constant 0 : index
    %c0_212 = arith.constant 0 : index
    %185 = vector.load %arg3[%c0_210, %c0_211, %c0_212] : memref<1x8x286xf32, #tpu.memory_space<vmem>>, vector<1x8x286xf32>
    %186 = vector.shape_cast %185 : vector<1x8x286xf32> to vector<8x286xf32>
    %187 = vector.shape_cast %184 : vector<8x286xf32> to vector<1x8x286xf32>
    tpu.vector_store %arg3[%c0_210, %c0_211, %c0_212], %187 {strides = array<i32>} : memref<1x8x286xf32, #tpu.memory_space<vmem>>, vector<1x8x286xf32>,
    return
  }
  func.func @transform_0(%arg0: i32) -> (i32, i32, i32) {
    %c0_i32 = arith.constant 0 : i32
    %c0_i32_0 = arith.constant 0 : i32
    %c0_i32_1 = arith.constant 0 : i32
    return %arg0, %c0_i32, %c0_i32_0 : i32, i32, i32
  }
  func.func @transform_1(%arg0: i32) -> (i32, i32) {
    %c0_i32 = arith.constant 0 : i32
    %c0_i32_0 = arith.constant 0 : i32
    %c0_i32_1 = arith.constant 0 : i32
    return %c0_i32, %c0_i32_0 : i32, i32
  }
  func.func @transform_2(%arg0: i32) -> (i32, i32, i32) {
    %c0_i32 = arith.constant 0 : i32
    %c0_i32_0 = arith.constant 0 : i32
    %c0_i32_1 = arith.constant 0 : i32
    return %arg0, %c0_i32, %c0_i32_0 : i32, i32, i32
  }
}

</mosaic_0001>

<llo_original>
// kernel: tpu_custom_call.1
$region0: #{tpu_custom_call.1}
  #allocation0 [shape = 'u32[]', space=smem, size = 0x4, offset = 0x4, fixed_abs, tag = 'smem constant byte address 0x4 - core index']
  #allocation1 [shape = 'u32[144,128]{1,0:T(1,128)}', space=vmem, size = 0x12000, scoped, tag = 'internal scratch']
  #allocation2 [shape = 'f32[4,324]{1,0:T(4,128)}', space=vmem, size = 0x1800, scoped, tag = 'scratch operand']
  #allocation3 [shape = 'f32[37,286]{1,0:T(8,128)}', space=vmem, size = 0xf000, scoped, tag = 'scratch operand']
  %s0 = inlined_call_operand.hbm [shape: f32[2,4,256], index: 0, kind: input, shape index: {}]
  %s1 = inlined_call_operand.hbm [shape: f32[8,37], index: 1, kind: input, shape index: {}]
  %s2 = inlined_call_operand.hbm [shape: f32[2,8,286], index: 2, kind: output, shape index: {}]
  %s3 = sld [smem:[#allocation0]]
  $region49: #{tpu_custom_call.1} parent=0
    _
  %s5 = ssub.s32 1, %s3
  %s6 = scalar_select 0, %s5, %s3
  $region1: #{tpu_custom_call.1} parent=0
    #allocation4 [shape = 'u8[8192]{0}', space=vmem, size = 0x2000, scoped, tag = 'input window, operand 0']
    #allocation5 [shape = 's32[2]{0}', space=sflag, size = 0x8, scoped, tag = 'scoped memory for tpu_custom_call.1']
    #allocation6 [shape = 's32[2]{0}', space=sflag, size = 0x8, scoped, tag = 'scoped memory for tpu_custom_call.1']
    #allocation7 [shape = 'u8[4096]{0}', space=vmem, size = 0x1000, scoped, tag = 'input window, operand 1, single buffered']
    #allocation8 [shape = 's32[1]{0}', space=sflag, size = 0x4, scoped, tag = 'scoped memory for tpu_custom_call.1']
    #allocation9 [shape = 'u8[24576]{0}', space=vmem, size = 0x6000, scoped, tag = 'output window, operand 0']
    %7 = vsyncpa [#allocation5], 0
    %s8 = scalar_lea.sflag [#allocation5], 1
    %9 = vsyncpa %s8, 0
    %10 = vsyncpa [#allocation8], 0
    %11 = vsyncpa [#allocation6], 0
    %s12 = scalar_lea.sflag [#allocation6], 1
    %13 = vsyncpa %s12, 0
    loop: start=0, step=1, limit=4
    $region2: #{tpu_custom_call.1} parent=1 // loop_pre_header
      _
    $region3: #{tpu_custom_call.1} parent=1 // loop_header
      %s15 = sphi 0, %s19
      %p16 = scmp.ge.s32.totalorder %s15, 4
      %s25 = sphi 0, %s27
      %s28 = sphi 0, %s25
      %s29 = sphi 0, %s28
      %s45 = sphi 0, %s29
      %s49 = sphi 0, %s49
      %s51 = sphi 0, %s49
      %s52 = sphi 0, %s51
      %s66 = sphi 0, %s52
      %s72 = sphi 0, %s74
      %s75 = sphi 0, %s72
      %s76 = sphi 0, %s75
      %s92 = sphi 0, %s76
    $region4: #{tpu_custom_call.1} parent=1 // loop_header_branch
      %18 = sbr.rel (%p16) target = $region8
    $region5: #{tpu_custom_call.1} parent=1 // loop_body
      %s20 = ssub.s32 %s15, 1
      %s21 = ssub.s32 %s15, 2
      %s22 = sadd.s32 %s15, 1
      %s23 = ssub.s32 %s15, %s22
      %p24 = scmp.eq.s32.totalorder %s23, 0
      %s26 = sadd.s32 %s25, 1
      %s27 = scalar_select %p24, %s25, %s26
      %p30 = pneg %p24
      %p31 = scmp.eq.s32.totalorder %s15, 1
      %p32 = por %p30, %p31
      %p33 = scmp.ne.s32.totalorder %s25, %s28
      %p34 = scmp.eq.s32.totalorder %s15, 0
      %p35 = por %p33, %p34
      %p36 = scmp.ne.s32.totalorder %s25, %s28
      %p37 = scmp.eq.s32.totalorder %s20, 1
      %p38 = por %p36, %p37
      %p39 = scmp.ne.s32.totalorder %s28, %s29
      %p40 = scmp.eq.s32.totalorder %s20, 0
      %p41 = por %p39, %p40
      %p42 = scmp.ne.s32.totalorder %s28, %s29
      %p43 = scmp.eq.s32.totalorder %s21, 1
      %p44 = por %p42, %p43
      %p46 = scmp.ne.s32.totalorder %s29, %s45
      %p47 = scmp.eq.s32.totalorder %s21, 0
      %p48 = por %p46, %p47
      %s50 = sadd.s32 %s49, 1
      %p53 = scmp.eq.s32.totalorder %s15, 1
      %p54 = scmp.ne.s32.totalorder %s49, %s51
      %p55 = scmp.eq.s32.totalorder %s15, 0
      %p56 = por %p54, %p55
      %p57 = scmp.ne.s32.totalorder %s49, %s51
      %p58 = scmp.eq.s32.totalorder %s20, 1
      %p59 = por %p57, %p58
      %p60 = scmp.ne.s32.totalorder %s51, %s52
      %p61 = scmp.eq.s32.totalorder %s20, 0
      %p62 = por %p60, %p61
      %p63 = scmp.ne.s32.totalorder %s51, %s52
      %p64 = scmp.eq.s32.totalorder %s21, 1
      %p65 = por %p63, %p64
      %p67 = scmp.ne.s32.totalorder %s52, %s66
      %p68 = scmp.eq.s32.totalorder %s21, 0
      %p69 = por %p67, %p68
      %s70 = ssub.s32 %s15, %s22
      %p71 = scmp.eq.s32.totalorder %s70, 0
      %s73 = sadd.s32 %s72, 1
      %s74 = scalar_select %p71, %s72, %s73
      %p77 = pneg %p71
      %p78 = scmp.eq.s32.totalorder %s15, 1
      %p79 = por %p77, %p78
      %p80 = scmp.ne.s32.totalorder %s72, %s75
      %p81 = scmp.eq.s32.totalorder %s15, 0
      %p82 = por %p80, %p81
      %p83 = scmp.ne.s32.totalorder %s72, %s75
      %p84 = scmp.eq.s32.totalorder %s20, 1
      %p85 = por %p83, %p84
      %p86 = scmp.ne.s32.totalorder %s75, %s76
      %p87 = scmp.eq.s32.totalorder %s20, 0
      %p88 = por %p86, %p87
      %p89 = scmp.ne.s32.totalorder %s75, %s76
      %p90 = scmp.eq.s32.totalorder %s21, 1
      %p91 = por %p89, %p90
      %p93 = scmp.ne.s32.totalorder %s76, %s92
      %p94 = scmp.eq.s32.totalorder %s21, 0
      %p95 = por %p93, %p94
      %p96 = scmp.le.s32.totalorder 1, %s15
      %p97 = scmp.lt.s32.totalorder %s15, 3
      %p98 = pnand %p96, %p97
      %p99 = pneg %p98
      // Predicated region
      $region9: #{tpu_custom_call.1} parent=5 // pred_check
        _
      $region10: #{tpu_custom_call.1} parent=5 // pred_check_branch
        %101 = sbr.rel (%p98) target = $region12
      $region11: #{tpu_custom_call.1} parent=5 // pred_region
        %s102 = ssub.s32 %s15, 1
        // Predicated region
        $region13: #{tpu_custom_call.1} parent=11 // pred_check
          %p103 = pneg %p62
        $region14: #{tpu_custom_call.1} parent=11 // pred_check_branch
          %105 = sbr.rel (%p103) target = $region16
        $region15: #{tpu_custom_call.1} parent=11 // pred_region
          %s107 = ssub.s32 128, 128
          %108 = vsyncadd [#allocation8], %s107
          %s110 = sshll.u32 [#allocation7], 4
          %s111 = int_to_ptr.vmem [resolvable:$true] %s110
          %113 = dma.hbm_to_vmem [thread:$0]  %s1, 128, %s111, [#allocation8]
        $region16: #{tpu_custom_call.1} parent=11 // pred_fallthru
          _
      $region12: #{tpu_custom_call.1} parent=5 // pred_fallthru
        _
      %p114 = scmp.lt.s32.totalorder %s15, 2
      // Predicated region
      $region17: #{tpu_custom_call.1} parent=5 // pred_check
        %p115 = pneg %p114
      $region18: #{tpu_custom_call.1} parent=5 // pred_check_branch
        %117 = sbr.rel (%p115) target = $region20
      $region19: #{tpu_custom_call.1} parent=5 // pred_region
        // Predicated region
        $region21: #{tpu_custom_call.1} parent=19 // pred_check
          %p118 = pneg %p35
        $region22: #{tpu_custom_call.1} parent=19 // pred_check_branch
          %120 = sbr.rel (%p118) target = $region24
        $region23: #{tpu_custom_call.1} parent=19 // pred_region
          %s121 = sand.u32 %s25, 1
          %s122 = scalar_lea.sflag [#allocation5], %s121
          %s123 = sand.u32 %s25, 1
          %s124 = smul.addr %s123, 8
          %s125 = scalar_lea.vmem [#allocation4], %s124
          %s127 = ssub.s32 128, 128
          %128 = vsyncadd %s122, %s127
          %s129 = smul.addr %s15, 2
          %s130 = smul.addr %s129, 64
          %s131 = scalar_lea.hbm %s0, %s130
          %s133 = sshll.u32 %s125, 4
          %s134 = int_to_ptr.vmem [resolvable:$true] %s133
          %136 = dma.hbm_to_vmem [thread:$0]  %s131, 128, %s134, %s122
        $region24: #{tpu_custom_call.1} parent=19 // pred_fallthru
          _
      $region20: #{tpu_custom_call.1} parent=5 // pred_fallthru
        _
      %p137 = scmp.le.s32.totalorder 1, %s15
      %p138 = scmp.lt.s32.totalorder %s15, 3
      %p139 = pnand %p137, %p138
      %p140 = pneg %p139
      // Predicated region
      $region25: #{tpu_custom_call.1} parent=5 // pred_check
        _
      $region26: #{tpu_custom_call.1} parent=5 // pred_check_branch
        %142 = sbr.rel (%p139) target = $region28
      $region27: #{tpu_custom_call.1} parent=5 // pred_region
        %s143 = ssub.s32 %s15, 1
        %s144 = sand.u32 %s28, 1
        %s145 = scalar_lea.sflag [#allocation5], %s144
        %s146 = sand.u32 %s28, 1
        %s147 = smul.addr %s146, 8
        %s148 = scalar_lea.vmem [#allocation4], %s147
        // Predicated region
        $region29: #{tpu_custom_call.1} parent=27 // pred_check
          %p149 = pneg %p41
        $region30: #{tpu_custom_call.1} parent=27 // pred_check_branch
          %151 = sbr.rel (%p149) target = $region32
        $region31: #{tpu_custom_call.1} parent=27 // pred_region
          %152 = dma.done %s145, 128
        $region32: #{tpu_custom_call.1} parent=27 // pred_fallthru
          _
        // Predicated region
        $region33: #{tpu_custom_call.1} parent=27 // pred_check
          %p153 = pneg %p62
        $region34: #{tpu_custom_call.1} parent=27 // pred_check_branch
          %155 = sbr.rel (%p153) target = $region36
        $region35: #{tpu_custom_call.1} parent=27 // pred_region
          %156 = dma.done [#allocation8], 128
        $region36: #{tpu_custom_call.1} parent=27 // pred_fallthru
          _
        %s157 = sand.u32 %s28, 1
        %s158 = scalar_lea.sflag [#allocation5], %s157
        %s159 = sand.u32 %s28, 1
        %s160 = smul.addr %s159, 8
        %s161 = scalar_lea.vmem [#allocation4], %s160
        %p162 = pneg %p41
        %p163 = pneg %p38
        %p164 = pneg %p62
        %p165 = pneg %p59
        %p166 = pneg %p88
        %p167 = pneg %p85
        %s168 = sand.u32 %s75, 1
        %s169 = scalar_lea.sflag [#allocation6], %s168
        %s170 = sand.u32 %s75, 1
        %s171 = smul.addr %s170, 24
        %s172 = scalar_lea.vmem [#allocation9], %s171
        %v173 = vld [vmem:[%s148] sm:$0xf]
        %175 = vrot.lane.b32.xlu0 %v173, 113
        %v176 = vpop.permute.xlu0 %175
        %vm178 = vcmask 134152
        %179 = vst.msk [vmem:[#allocation2] sm:$0xf] %vm178, %v176
        %v180 = vld [vmem:[%s148] sm:$0xf]
        %182 = vrot.lane.b32.xlu0 %v180, 111
        %v183 = vpop.permute.xlu0 %182
        %vm185 = vcmask 3072
        %186 = vst.msk [vmem:[#allocation2] sm:$0xf] %vm185, %v183
        %v187 = vld [vmem:[%s148] sm:$0xf]
        %189 = vrot.lane.b32.xlu0 %v187, 115
        %v190 = vpop.permute.xlu0 %189
        %vm192 = vcmask 142472
        %193 = vst.msk [vmem:[#allocation2] sm:$0xf] %vm192, %v190
        %v194 = vld [vmem:[%s148] sm:$0xf]
        %196 = vrot.lane.b32.xlu0 %v194, 19
        %v197 = vpop.permute.xlu0 %196
        %vm199 = vcmask 281752
        %200 = vst.msk [vmem:[#allocation2] sm:$0xf] %vm199, %v197
        %v201 = vld [vmem:[%s148] sm:$0xf]
        %203 = vrot.lane.b32.xlu0 %v201, 17
        %v204 = vpop.permute.xlu0 %203
        %vm206 = vcmask 150672
        %207 = vst.msk [vmem:[#allocation2] sm:$0xf] %vm206, %v204
        %v208 = vld [vmem:[%s148] sm:$0xf]
        %210 = vrot.lane.b32.xlu0 %v208, 21
        %v211 = vpop.permute.xlu0 %210
        %vm213 = vcmask 290072
        %214 = vst.msk [vmem:[#allocation2] sm:$0xf] %vm213, %v211
        %v215 = vld [vmem:[%s148] sm:$0xf]
        %217 = vrot.lane.b32.xlu0 %v215, 21
        %v218 = vpop.permute.xlu0 %217
        %vm220 = vcmask 429352
        %221 = vst.msk [vmem:[#allocation2] sm:$0xf] %vm220, %v218
        %v222 = vld [vmem:[%s148] sm:$0xf]
        %224 = vrot.lane.b32.xlu0 %v222, 19
        %v225 = vpop.permute.xlu0 %224
        %vm227 = vcmask 298272
        %228 = vst.msk [vmem:[#allocation2] sm:$0xf] %vm227, %v225
        %v229 = vld [vmem:[%s148] sm:$0xf]
        %231 = vrot.lane.b32.xlu0 %v229, 23
        %v232 = vpop.permute.xlu0 %231
        %vm234 = vcmask 437672
        %235 = vst.msk [vmem:[#allocation2] sm:$0xf] %vm234, %v232
        %v236 = vld [vmem:[%s148] sm:$0xf]
        %238 = vrot.lane.b32.xlu0 %v236, 23
        %v239 = vpop.permute.xlu0 %238
        %vm241 = vcmask 576952
        %242 = vst.msk [vmem:[#allocation2] sm:$0xf] %vm241, %v239
        %v243 = vld [vmem:[%s148] sm:$0xf]
        %245 = vrot.lane.b32.xlu0 %v243, 21
        %v246 = vpop.permute.xlu0 %245
        %vm248 = vcmask 445872
        %249 = vst.msk [vmem:[#allocation2] sm:$0xf] %vm248, %v246
        %v250 = vld [vmem:[%s148] sm:$0xf]
        %252 = vrot.lane.b32.xlu0 %v250, 25
        %v253 = vpop.permute.xlu0 %252
        %vm255 = vcmask 585272
        %256 = vst.msk [vmem:[#allocation2] sm:$0xf] %vm255, %v253
        %v257 = vld [vmem:[%s148] sm:$0xf]
        %259 = vrot.lane.b32.xlu0 %v257, 25
        %v260 = vpop.permute.xlu0 %259
        %vm262 = vcmask 724552
        %263 = vst.msk [vmem:[#allocation2] sm:$0xf] %vm262, %v260
        %v264 = vld [vmem:[%s148] sm:$0xf]
        %266 = vrot.lane.b32.xlu0 %v264, 23
        %v267 = vpop.permute.xlu0 %266
        %vm269 = vcmask 593472
        %270 = vst.msk [vmem:[#allocation2] sm:$0xf] %vm269, %v267
        %v271 = vld [vmem:[%s148] sm:$0xf]
        %273 = vrot.lane.b32.xlu0 %v271, 27
        %v274 = vpop.permute.xlu0 %273
        %vm276 = vcmask 732872
        %277 = vst.msk [vmem:[#allocation2] sm:$0xf] %vm276, %v274
        %v278 = vld [vmem:[%s148] sm:$0xf]
        %280 = vrot.lane.b32.xlu0 %v278, 27
        %v281 = vpop.permute.xlu0 %280
        %vm283 = vcmask 872152
        %284 = vst.msk [vmem:[#allocation2] sm:$0xf] %vm283, %v281
        %v285 = vld [vmem:[%s148] sm:$0xf]
        %287 = vrot.lane.b32.xlu0 %v285, 25
        %v288 = vpop.permute.xlu0 %287
        %vm290 = vcmask 741072
        %291 = vst.msk [vmem:[#allocation2] sm:$0xf] %vm290, %v288
        %v292 = vld [vmem:[%s148] sm:$0xf]
        %294 = vrot.lane.b32.xlu0 %v292, 29
        %v295 = vpop.permute.xlu0 %294
        %vm297 = vcmask 880472
        %298 = vst.msk [vmem:[#allocation2] sm:$0xf] %vm297, %v295
        %v299 = vld [vmem:[%s148] sm:$0xf]
        %301 = vrot.lane.b32.xlu0 %v299, 29
        %v302 = vpop.permute.xlu0 %301
        %vm304 = vcmask 1019752
        %305 = vst.msk [vmem:[#allocation2] sm:$0xf] %vm304, %v302
        %v306 = vld [vmem:[%s148] sm:$0xf]
        %308 = vrot.lane.b32.xlu0 %v306, 27
        %v309 = vpop.permute.xlu0 %308
        %vm311 = vcmask 888672
        %312 = vst.msk [vmem:[#allocation2] sm:$0xf] %vm311, %v309
        %v313 = vld [vmem:[%s148] sm:$0xf]
        %315 = vrot.lane.b32.xlu0 %v313, 31
        %v316 = vpop.permute.xlu0 %315
        %vm318 = vcmask 1028072
        %319 = vst.msk [vmem:[#allocation2] sm:$0xf] %vm318, %v316
        %v320 = vld [vmem:[%s148] sm:$0xf]
        %322 = vrot.lane.b32.xlu0 %v320, 31
        %v323 = vpop.permute.xlu0 %322
        %v324 = vrot.slane %v323, 4
        %vm325 = vcmask 252928
        %v326 = vsel %vm325, %v324, %v323
        %vm328 = vcmask 1044472
        %vm329 = vcmask 121860
        %vm330 = vmor %vm329, %vm328
        %331 = vst.msk [vmem:[#allocation2] sm:$0xff] %vm330, %v326
        %v332 = vld [vmem:[%s148] sm:$0xf]
        %334 = vrot.lane.b32.xlu0 %v332, 29
        %v335 = vpop.permute.xlu0 %334
        %vm337 = vcmask 1036272
        %338 = vst.msk [vmem:[#allocation2] sm:$0xf] %vm337, %v335
        %v339 = vld [vmem:[%s148] sm:$0xf]
        %341 = vrot.lane.b32.xlu0 %v339, 33
        %v342 = vpop.permute.xlu0 %341
        %vm344 = vcmask 126072
        %345 = vst.msk [vmem:[#allocation2 + $0x4] sm:$0xf] %vm344, %v342
        %v346 = vld [vmem:[%s148] sm:$0xf]
        %348 = vrot.lane.b32.xlu0 %v346, 33
        %v349 = vpop.permute.xlu0 %348
        %vm351 = vcmask 265352
        %352 = vst.msk [vmem:[#allocation2 + $0x4] sm:$0xf] %vm351, %v349
        %v353 = vld [vmem:[%s148] sm:$0xf]
        %355 = vrot.lane.b32.xlu0 %v353, 31
        %v356 = vpop.permute.xlu0 %355
        %vm358 = vcmask 134272
        %359 = vst.msk [vmem:[#allocation2 + $0x4] sm:$0xf] %vm358, %v356
        %v360 = vld [vmem:[%s148] sm:$0xf]
        %362 = vrot.lane.b32.xlu0 %v360, 35
        %v363 = vpop.permute.xlu0 %362
        %vm365 = vcmask 273672
        %366 = vst.msk [vmem:[#allocation2 + $0x4] sm:$0xf] %vm365, %v363
        %v367 = vld [vmem:[%s148 + $0x4] sm:$0xf]
        %369 = vrot.lane.b32.xlu0 %v367, 35
        %v370 = vpop.permute.xlu0 %369
        %vm372 = vcmask 412952
        %373 = vst.msk [vmem:[#allocation2 + $0x4] sm:$0xf] %vm372, %v370
        %v374 = vld [vmem:[%s148 + $0x4] sm:$0xf]
        %376 = vrot.lane.b32.xlu0 %v374, 33
        %v377 = vpop.permute.xlu0 %376
        %vm379 = vcmask 281872
        %380 = vst.msk [vmem:[#allocation2 + $0x4] sm:$0xf] %vm379, %v377
        %v381 = vld [vmem:[%s148 + $0x4] sm:$0xf]
        %383 = vrot.lane.b32.xlu0 %v381, 37
        %v384 = vpop.permute.xlu0 %383
        %vm386 = vcmask 421272
        %387 = vst.msk [vmem:[#allocation2 + $0x4] sm:$0xf] %vm386, %v384
        %v388 = vld [vmem:[%s148 + $0x4] sm:$0xf]
        %390 = vrot.lane.b32.xlu0 %v388, 37
        %v391 = vpop.permute.xlu0 %390
        %vm393 = vcmask 560552
        %394 = vst.msk [vmem:[#allocation2 + $0x4] sm:$0xf] %vm393, %v391
        %v395 = vld [vmem:[%s148 + $0x4] sm:$0xf]
        %397 = vrot.lane.b32.xlu0 %v395, 35
        %v398 = vpop.permute.xlu0 %397
        %vm400 = vcmask 429472
        %401 = vst.msk [vmem:[#allocation2 + $0x4] sm:$0xf] %vm400, %v398
        %v402 = vld [vmem:[%s148 + $0x4] sm:$0xf]
        %404 = vrot.lane.b32.xlu0 %v402, 39
        %v405 = vpop.permute.xlu0 %404
        %vm407 = vcmask 568872
        %408 = vst.msk [vmem:[#allocation2 + $0x4] sm:$0xf] %vm407, %v405
        %v409 = vld [vmem:[%s148 + $0x4] sm:$0xf]
        %411 = vrot.lane.b32.xlu0 %v409, 39
        %v412 = vpop.permute.xlu0 %411
        %vm414 = vcmask 708152
        %415 = vst.msk [vmem:[#allocation2 + $0x4] sm:$0xf] %vm414, %v412
        %v416 = vld [vmem:[%s148 + $0x4] sm:$0xf]
        %418 = vrot.lane.b32.xlu0 %v416, 37
        %v419 = vpop.permute.xlu0 %418
        %vm421 = vcmask 577072
        %422 = vst.msk [vmem:[#allocation2 + $0x4] sm:$0xf] %vm421, %v419
        %v423 = vld [vmem:[%s148 + $0x4] sm:$0xf]
        %425 = vrot.lane.b32.xlu0 %v423, 41
        %v426 = vpop.permute.xlu0 %425
        %vm428 = vcmask 716472
        %429 = vst.msk [vmem:[#allocation2 + $0x4] sm:$0xf] %vm428, %v426
        %v430 = vld [vmem:[%s148 + $0x4] sm:$0xf]
        %432 = vrot.lane.b32.xlu0 %v430, 41
        %v433 = vpop.permute.xlu0 %432
        %vm435 = vcmask 855752
        %436 = vst.msk [vmem:[#allocation2 + $0x4] sm:$0xf] %vm435, %v433
        %v437 = vld [vmem:[%s148 + $0x4] sm:$0xf]
        %439 = vrot.lane.b32.xlu0 %v437, 39
        %v440 = vpop.permute.xlu0 %439
        %vm442 = vcmask 724672
        %443 = vst.msk [vmem:[#allocation2 + $0x4] sm:$0xf] %vm442, %v440
        %v444 = vld [vmem:[%s148 + $0x4] sm:$0xf]
        %446 = vrot.lane.b32.xlu0 %v444, 43
        %v447 = vpop.permute.xlu0 %446
        %vm449 = vcmask 864072
        %450 = vst.msk [vmem:[#allocation2 + $0x4] sm:$0xf] %vm449, %v447
        %v451 = vld [vmem:[%s148 + $0x4] sm:$0xf]
        %453 = vrot.lane.b32.xlu0 %v451, 43
        %v454 = vpop.permute.xlu0 %453
        %vm456 = vcmask 1003352
        %457 = vst.msk [vmem:[#allocation2 + $0x4] sm:$0xf] %vm456, %v454
        %v458 = vld [vmem:[%s148 + $0x4] sm:$0xf]
        %460 = vrot.lane.b32.xlu0 %v458, 41
        %v461 = vpop.permute.xlu0 %460
        %vm463 = vcmask 872272
        %464 = vst.msk [vmem:[#allocation2 + $0x4] sm:$0xf] %vm463, %v461
        %v465 = vld [vmem:[%s148 + $0x4] sm:$0xf]
        %467 = vrot.lane.b32.xlu0 %v465, 45
        %v468 = vpop.permute.xlu0 %467
        %vm470 = vcmask 1011672
        %471 = vst.msk [vmem:[#allocation2 + $0x4] sm:$0xf] %vm470, %v468
        %v472 = vld [vmem:[%s148 + $0x4] sm:$0xf]
        %474 = vrot.lane.b32.xlu0 %v472, 45
        %v475 = vpop.permute.xlu0 %474
        %v476 = vrot.slane %v475, 4
        %vm477 = vcmask 367616
        %v478 = vsel %vm477, %v476, %v475
        %vm480 = vcmask 1044456
        %vm481 = vcmask 105476
        %vm482 = vmor %vm481, %vm480
        %483 = vst.msk [vmem:[#allocation2 + $0x4] sm:$0xff] %vm482, %v478
        %v484 = vld [vmem:[%s148 + $0x4] sm:$0xf]
        %486 = vrot.lane.b32.xlu0 %v484, 43
        %v487 = vpop.permute.xlu0 %486
        %vm489 = vcmask 1019872
        %490 = vst.msk [vmem:[#allocation2 + $0x4] sm:$0xf] %vm489, %v487
        %v491 = vld [vmem:[%s148 + $0x4] sm:$0xf]
        %493 = vrot.lane.b32.xlu0 %v491, 47
        %v494 = vpop.permute.xlu0 %493
        %vm496 = vcmask 109672
        %497 = vst.msk [vmem:[#allocation2 + $0x8] sm:$0xf] %vm496, %v494
        %v498 = vld [vmem:[%s148 + $0x4] sm:$0xf]
        %500 = vrot.lane.b32.xlu0 %v498, 47
        %v501 = vpop.permute.xlu0 %500
        %vm503 = vcmask 248952
        %504 = vst.msk [vmem:[#allocation2 + $0x8] sm:$0xf] %vm503, %v501
        %v505 = vld [vmem:[%s148 + $0x4] sm:$0xf]
        %507 = vrot.lane.b32.xlu0 %v505, 45
        %v508 = vpop.permute.xlu0 %507
        %vm510 = vcmask 117872
        %511 = vst.msk [vmem:[#allocation2 + $0x8] sm:$0xf] %vm510, %v508
        %v512 = vld [vmem:[%s148 + $0x4] sm:$0xf]
        %514 = vrot.lane.b32.xlu0 %v512, 49
        %v515 = vpop.permute.xlu0 %514
        %vm517 = vcmask 257272
        %518 = vst.msk [vmem:[#allocation2 + $0x8] sm:$0xf] %vm517, %v515
        %v519 = vld [vmem:[%s148 + $0x4] sm:$0xf]
        %521 = vrot.lane.b32.xlu0 %v519, 49
        %v522 = vpop.permute.xlu0 %521
        %vm524 = vcmask 396552
        %525 = vst.msk [vmem:[#allocation2 + $0x8] sm:$0xf] %vm524, %v522
        %v526 = vld [vmem:[%s148 + $0x4] sm:$0xf]
        %528 = vrot.lane.b32.xlu0 %v526, 47
        %v529 = vpop.permute.xlu0 %528
        %vm531 = vcmask 265472
        %532 = vst.msk [vmem:[#allocation2 + $0x8] sm:$0xf] %vm531, %v529
        %v533 = vld [vmem:[%s148 + $0x4] sm:$0xf]
        %535 = vrot.lane.b32.xlu0 %v533, 51
        %v536 = vpop.permute.xlu0 %535
        %vm538 = vcmask 404872
        %539 = vst.msk [vmem:[#allocation2 + $0x8] sm:$0xf] %vm538, %v536
        %v540 = vld [vmem:[%s148 + $0x4] sm:$0xf]
        %542 = vrot.lane.b32.xlu0 %v540, 83
        %v543 = vpop.permute.xlu0 %542
        %vm545 = vcmask 544152
        %546 = vst.msk [vmem:[#allocation2 + $0x8] sm:$0xf] %vm545, %v543
        %v547 = vld [vmem:[%s148 + $0x4] sm:$0xf]
        %549 = vrot.lane.b32.xlu0 %v547, 81
        %v550 = vpop.permute.xlu0 %549
        %vm552 = vcmask 413072
        %553 = vst.msk [vmem:[#allocation2 + $0x8] sm:$0xf] %vm552, %v550
        %v554 = vld [vmem:[%s148 + $0x4] sm:$0xf]
        %556 = vrot.lane.b32.xlu0 %v554, 85
        %v557 = vpop.permute.xlu0 %556
        %vm559 = vcmask 552472
        %560 = vst.msk [vmem:[#allocation2 + $0x8] sm:$0xf] %vm559, %v557
        %v561 = vld [vmem:[#allocation2] sm:$0xff]
        %v562 = vld [vmem:[#allocation2 + $0x8] sm:$0xf]
        %v564 = vcombine.high %v561, %v561
        %566 = vst [vmem:[#allocation3] sm:$0xf] %v561
        %567 = vst [vmem:[#allocation3 + $0x8] sm:$0xf] %v564
        %vm568 = vcmask 240640
        %569 = vst.msk [vmem:[#allocation3 + $0x10] sm:$0xf] %vm568, %v562
        %v570 = vld [vmem:[#allocation2] sm:$0xff]
        %v571 = vld [vmem:[#allocation2 + $0x8] sm:$0xf]
        %v574 = vcombine.low %v570, %v570
        %v575 = vcombine.low %v571, %v571
        %576 = vrot.lane.b32.xlu0 %v574, 127
        %v577 = vpop.permute.xlu0 %576
        %578 = vrot.lane.b32.xlu0 %v570, 127
        %v579 = vpop.permute.xlu0 %578
        %580 = vrot.lane.b32.xlu0 %v575, 127
        %v581 = vpop.permute.xlu0 %580
        %vm582 = vcmask 1039360
        %v583 = vsel %vm582, %v577, %v579
        %v584 = vsel %vm582, %v579, %v581
        %588 = vst [vmem:[#allocation3] sm:$0xf0] %v583
        %589 = vst [vmem:[#allocation3 + $0x8] sm:$0xf0] %v584
        %vm590 = vcmask 244740
        %591 = vst.msk [vmem:[#allocation3 + $0x10] sm:$0xf0] %vm590, %v581
        %v592 = vld [vmem:[#allocation2] sm:$0xff]
        %v593 = vld [vmem:[#allocation2 + $0x8] sm:$0xf]
        %v596 = vcombine.high %v592, %v592
        %597 = vrot.lane.b32.xlu0 %v592, 126
        %v598 = vpop.permute.xlu0 %597
        %599 = vrot.lane.b32.xlu0 %v596, 126
        %v600 = vpop.permute.xlu0 %599
        %601 = vrot.lane.b32.xlu0 %v593, 126
        %v602 = vpop.permute.xlu0 %601
        %vm603 = vcmask 1031168
        %v604 = vsel %vm603, %v598, %v600
        %v605 = vsel %vm603, %v600, %v602
        %609 = vst [vmem:[#allocation3 + $0x18] sm:$0xf] %v604
        %610 = vst [vmem:[#allocation3 + $0x20] sm:$0xf] %v605
        %611 = vst.msk [vmem:[#allocation3 + $0x28] sm:$0xf] %vm568, %v602
        %v612 = vld [vmem:[#allocation2] sm:$0xff]
        %v613 = vld [vmem:[#allocation2 + $0x8] sm:$0xf]
        %v616 = vcombine.low %v612, %v612
        %v617 = vcombine.low %v613, %v613
        %618 = vrot.lane.b32.xlu0 %v616, 110
        %v619 = vpop.permute.xlu0 %618
        %620 = vrot.lane.b32.xlu0 %v612, 110
        %v621 = vpop.permute.xlu0 %620
        %622 = vrot.lane.b32.xlu0 %v617, 110
        %v623 = vpop.permute.xlu0 %622
        %vm624 = vcmask 900096
        %v625 = vsel %vm624, %v619, %v621
        %v626 = vsel %vm624, %v621, %v623
        %630 = vst [vmem:[#allocation3 + $0x18] sm:$0xf0] %v625
        %631 = vst [vmem:[#allocation3 + $0x20] sm:$0xf0] %v626
        %632 = vst.msk [vmem:[#allocation3 + $0x28] sm:$0xf0] %vm590, %v623
        %v633 = vld [vmem:[#allocation2] sm:$0xff]
        %v634 = vld [vmem:[#allocation2 + $0x8] sm:$0xf]
        %v637 = vcombine.high %v633, %v633
        %638 = vrot.lane.b32.xlu0 %v633, 109
        %v639 = vpop.permute.xlu0 %638
        %640 = vrot.lane.b32.xlu0 %v637, 109
        %v641 = vpop.permute.xlu0 %640
        %642 = vrot.lane.b32.xlu0 %v634, 109
        %v643 = vpop.permute.xlu0 %642
        %vm644 = vcmask 891904
        %v645 = vsel %vm644, %v639, %v641
        %v646 = vsel %vm644, %v641, %v643
        %650 = vst [vmem:[#allocation3 + $0x30] sm:$0xf] %v645
        %651 = vst [vmem:[#allocation3 + $0x38] sm:$0xf] %v646
        %652 = vst.msk [vmem:[#allocation3 + $0x40] sm:$0xf] %vm568, %v643
        %v653 = vld [vmem:[#allocation2] sm:$0xff]
        %v654 = vld [vmem:[#allocation2 + $0x8] sm:$0xf]
        %v657 = vcombine.low %v653, %v653
        %v658 = vcombine.low %v654, %v654
        %659 = vrot.lane.b32.xlu0 %v657, 108
        %v660 = vpop.permute.xlu0 %659
        %661 = vrot.lane.b32.xlu0 %v653, 108
        %v662 = vpop.permute.xlu0 %661
        %663 = vrot.lane.b32.xlu0 %v658, 108
        %v664 = vpop.permute.xlu0 %663
        %vm665 = vcmask 883712
        %v666 = vsel %vm665, %v660, %v662
        %v667 = vsel %vm665, %v662, %v664
        %671 = vst [vmem:[#allocation3 + $0x30] sm:$0xf0] %v666
        %672 = vst [vmem:[#allocation3 + $0x38] sm:$0xf0] %v667
        %673 = vst.msk [vmem:[#allocation3 + $0x40] sm:$0xf0] %vm590, %v664
        %v674 = vld [vmem:[#allocation2] sm:$0xff]
        %v675 = vld [vmem:[#allocation2 + $0x8] sm:$0xf]
        %v678 = vcombine.high %v674, %v674
        %679 = vrot.lane.b32.xlu0 %v674, 92
        %v680 = vpop.permute.xlu0 %679
        %681 = vrot.lane.b32.xlu0 %v678, 92
        %v682 = vpop.permute.xlu0 %681
        %683 = vrot.lane.b32.xlu0 %v675, 92
        %v684 = vpop.permute.xlu0 %683
        %vm685 = vcmask 752640
        %v686 = vsel %vm685, %v680, %v682
        %v687 = vsel %vm685, %v682, %v684
        %691 = vst [vmem:[#allocation3 + $0x48] sm:$0xf] %v686
        %692 = vst [vmem:[#allocation3 + $0x50] sm:$0xf] %v687
        %693 = vst.msk [vmem:[#allocation3 + $0x58] sm:$0xf] %vm568, %v684
        %v694 = vld [vmem:[#allocation2] sm:$0xff]
        %v695 = vld [vmem:[#allocation2 + $0x8] sm:$0xf]
        %v698 = vcombine.low %v694, %v694
        %v699 = vcombine.low %v695, %v695
        %700 = vrot.lane.b32.xlu0 %v698, 91
        %v701 = vpop.permute.xlu0 %700
        %702 = vrot.lane.b32.xlu0 %v694, 91
        %v703 = vpop.permute.xlu0 %702
        %704 = vrot.lane.b32.xlu0 %v699, 91
        %v705 = vpop.permute.xlu0 %704
        %vm706 = vcmask 744448
        %v707 = vsel %vm706, %v701, %v703
        %v708 = vsel %vm706, %v703, %v705
        %712 = vst [vmem:[#allocation3 + $0x48] sm:$0xf0] %v707
        %713 = vst [vmem:[#allocation3 + $0x50] sm:$0xf0] %v708
        %714 = vst.msk [vmem:[#allocation3 + $0x58] sm:$0xf0] %vm590, %v705
        %v715 = vld [vmem:[#allocation2] sm:$0xff]
        %v716 = vld [vmem:[#allocation2 + $0x8] sm:$0xf]
        %v719 = vcombine.high %v715, %v715
        %720 = vrot.lane.b32.xlu0 %v715, 90
        %v721 = vpop.permute.xlu0 %720
        %722 = vrot.lane.b32.xlu0 %v719, 90
        %v723 = vpop.permute.xlu0 %722
        %724 = vrot.lane.b32.xlu0 %v716, 90
        %v725 = vpop.permute.xlu0 %724
        %vm726 = vcmask 736256
        %v727 = vsel %vm726, %v721, %v723
        %v728 = vsel %vm726, %v723, %v725
        %732 = vst [vmem:[#allocation3 + $0x60] sm:$0xf] %v727
        %733 = vst [vmem:[#allocation3 + $0x68] sm:$0xf] %v728
        %734 = vst.msk [vmem:[#allocation3 + $0x70] sm:$0xf] %vm568, %v725
        %v735 = vlaneseq
        %vm736 = vcmp.ge.s32.totalorder %v735, 0
        %vm737 = vcmp.lt.s32.totalorder %v735, 286
        %vm738 = vmand %vm736, %vm737
        %s739 = scalar_lea.vmem [#allocation3], 100
        %740 = vst.msk [vmem:[%s739] ss:$8 sm:$0x7] %vm738, 1.0
        %741 = vst.msk [vmem:[%s739] ss:$8 sm:$0x0] %vm738, 1.0
        %v742 = vld [vmem:[#allocation7] sm:$0xff]
        %v743 = vld [vmem:[#allocation3] sm:$0xff]
        %v744 = vld [vmem:[#allocation3 + $0x8] sm:$0xff]
        %v745 = vld [vmem:[#allocation3 + $0x10] sm:$0xff]
        %v746 = vld [vmem:[#allocation3 + $0x18] sm:$0xff]
        %v747 = vld [vmem:[#allocation3 + $0x20] sm:$0xff]
        %v748 = vld [vmem:[#allocation3 + $0x28] sm:$0xff]
        %v749 = vld [vmem:[#allocation3 + $0x30] sm:$0xff]
        %v750 = vld [vmem:[#allocation3 + $0x38] sm:$0xff]
        %v751 = vld [vmem:[#allocation3 + $0x40] sm:$0xff]
        %v752 = vld [vmem:[#allocation3 + $0x48] sm:$0xff]
        %v753 = vld [vmem:[#allocation3 + $0x50] sm:$0xff]
        %v754 = vld [vmem:[#allocation3 + $0x58] sm:$0xff]
        %v755 = vld [vmem:[#allocation3 + $0x60] sm:$0x1f]
        %v756 = vld [vmem:[#allocation3 + $0x68] sm:$0x1f]
        %v757 = vld [vmem:[#allocation3 + $0x70] sm:$0x1f]
        %vm758 = vcmask 302080
        %v760 = vsel %vm758, %v742, 0
        %vm762 = vcmask 1044480
        %v764 = vsel %vm762, %v755, 0
        %v767 = vsel %vm762, %v756, 0
        %v770 = vsel %vm762, %v757, 0
        %772 = vmatprep.subr.mxu0 %v744
        %773 = vmatpush1.msra.mxu0 %v743
        %774 = vmatprep.subr.mxu0 %v747
        %775 = vmatpush1.msra.mxu0 %v746
        %776 = vmatprep.subr.mxu0 %v750
        %777 = vmatpush1.msra.mxu0 %v749
        %778 = vmatprep.subr.mxu0 %v753
        %779 = vmatpush1.msra.mxu0 %v752
        %780 = vmatprep.subr.mxu0 %v767
        %781 = vmatpush1.msra.mxu0 %v764
        %782 = vmatprep.subr.mxu0 0.0
        %783 = vmatpush1.msra.mxu0 0.0
        %784 = vmatprep.subr.mxu0 0.0
        %785 = vmatpush1.msra.mxu0 0.0
        %786 = vmatprep.subr.mxu0 0.0
        %787 = vmatpush1.msra.mxu0 0.0
        %788 = vmatprep.subr.mxu0 0.0
        %789 = vmatpush1.msra.mxu0 0.0
        %790 = vmatprep.subr.mxu0 0.0
        %791 = vmatpush1.msra.mxu0 0.0
        %792 = vmatprep.subr.mxu0 0.0
        %793 = vmatpush1.msra.mxu0 0.0
        %794 = vmatprep.subr.mxu0 0.0
        %795 = vmatpush1.msra.mxu0 0.0
        %796 = vmatprep.subr.mxu0 0.0
        %797 = vmatpush1.msra.mxu0 0.0
        %798 = vmatprep.subr.mxu0 0.0
        %799 = vmatpush1.msra.mxu0 0.0
        %800 = vmatprep.subr.mxu0 0.0
        %801 = vmatpush1.msra.mxu0 0.0
        %802 = vmatprep.subr.mxu0 0.0
        %803 = vmatpush1.msra.mxu0 0.0
        %804 = vmatprep.subr.mxu0 0.0
        %805 = vmatpush1.msra.mxu0 0.0
        %806 = vmatprep.subr.mxu0 0.0
        %807 = vmatpush1.msra.mxu0 0.0
        %808 = vmatprep.subr.mxu0 0.0
        %809 = vmatpush1.msra.mxu0 0.0
        %810 = vmatprep.subr.mxu0 0.0
        %811 = vmatpush1.msra.mxu0 0.0
        %812 = vmatprep.subr.mxu0 0.0
        %813 = vmatpush1.msra.mxu0 0.0
        %814 = vmatprep.subr.mxu0 0.0
        %815 = vmatpush1.msra.mxu0 0.0
        %816 = vmatprep.subr.mxu0 0.0
        %817 = vmatpush1.msra.mxu0 0.0
        %818 = vmatprep.subr.mxu0 0.0
        %819 = vmatpush1.msra.mxu0 0.0
        %820 = vmatprep.subr.mxu0 0.0
        %821 = vmatpush1.msra.mxu0 0.0
        %822 = vmatprep.subr.mxu0 0.0
        %823 = vmatpush1.msra.mxu0 0.0
        %824 = vmatprep.subr.mxu0 0.0
        %825 = vmatpush1.msra.mxu0 0.0
        %826 = vmatprep.subr.mxu0 0.0
        %827 = vmatpush1.msra.mxu0 0.0
        %828 = vmatprep.subr.mxu0 0.0
        %829 = vmatpush1.msra.mxu0 0.0
        %830 = vmatprep.subr.mxu0 0.0
        %831 = vmatpush1.msra.mxu0 0.0
        %832 = vmatprep.subr.mxu0 0.0
        %833 = vmatpush1.msra.mxu0 0.0
        %834 = vmatprep.subr.mxu0 0.0
        %835 = vmatpush1.msra.mxu0 0.0
        %836 = vmatprep.mubr.f32.mxu0 0.0
        %837 = vmatmul.mubr.f32.gmra.mrb[0].mxu0 %v760
        %v838 = vpop.f32.mrb[0].mxu0
        %v839 = vadd.f32 0.0, %v838
        %v840 = vpop.f32.mrb[0].mxu0
        %v841 = vadd.f32 0.0, %v840
        %842 = vdwg.mxu0
        %843 = vmatprep.subr.mxu0 0.0
        %844 = vmatpush1.msra.mxu0 %v745
        %845 = vmatprep.subr.mxu0 0.0
        %846 = vmatpush1.msra.mxu0 %v748
        %847 = vmatprep.subr.mxu0 0.0
        %848 = vmatpush1.msra.mxu0 %v751
        %849 = vmatprep.subr.mxu0 0.0
        %850 = vmatpush1.msra.mxu0 %v754
        %851 = vmatprep.subr.mxu0 0.0
        %852 = vmatpush1.msra.mxu0 %v770
        %853 = vmatprep.subr.mxu0 0.0
        %854 = vmatpush1.msra.mxu0 0.0
        %855 = vmatprep.subr.mxu0 0.0
        %856 = vmatpush1.msra.mxu0 0.0
        %857 = vmatprep.subr.mxu0 0.0
        %858 = vmatpush1.msra.mxu0 0.0
        %859 = vmatprep.subr.mxu0 0.0
        %860 = vmatpush1.msra.mxu0 0.0
        %861 = vmatprep.subr.mxu0 0.0
        %862 = vmatpush1.msra.mxu0 0.0
        %863 = vmatprep.subr.mxu0 0.0
        %864 = vmatpush1.msra.mxu0 0.0
        %865 = vmatprep.subr.mxu0 0.0
        %866 = vmatpush1.msra.mxu0 0.0
        %867 = vmatprep.subr.mxu0 0.0
        %868 = vmatpush1.msra.mxu0 0.0
        %869 = vmatprep.subr.mxu0 0.0
        %870 = vmatpush1.msra.mxu0 0.0
        %871 = vmatprep.subr.mxu0 0.0
        %872 = vmatpush1.msra.mxu0 0.0
        %873 = vmatprep.subr.mxu0 0.0
        %874 = vmatpush1.msra.mxu0 0.0
        %875 = vmatprep.subr.mxu0 0.0
        %876 = vmatpush1.msra.mxu0 0.0
        %877 = vmatprep.subr.mxu0 0.0
        %878 = vmatpush1.msra.mxu0 0.0
        %879 = vmatprep.subr.mxu0 0.0
        %880 = vmatpush1.msra.mxu0 0.0
        %881 = vmatprep.subr.mxu0 0.0
        %882 = vmatpush1.msra.mxu0 0.0
        %883 = vmatprep.subr.mxu0 0.0
        %884 = vmatpush1.msra.mxu0 0.0
        %885 = vmatprep.subr.mxu0 0.0
        %886 = vmatpush1.msra.mxu0 0.0
        %887 = vmatprep.subr.mxu0 0.0
        %888 = vmatpush1.msra.mxu0 0.0
        %889 = vmatprep.subr.mxu0 0.0
        %890 = vmatpush1.msra.mxu0 0.0
        %891 = vmatprep.subr.mxu0 0.0
        %892 = vmatpush1.msra.mxu0 0.0
        %893 = vmatprep.subr.mxu0 0.0
        %894 = vmatpush1.msra.mxu0 0.0
        %895 = vmatprep.subr.mxu0 0.0
        %896 = vmatpush1.msra.mxu0 0.0
        %897 = vmatprep.subr.mxu0 0.0
        %898 = vmatpush1.msra.mxu0 0.0
        %899 = vmatprep.subr.mxu0 0.0
        %900 = vmatpush1.msra.mxu0 0.0
        %901 = vmatprep.subr.mxu0 0.0
        %902 = vmatpush1.msra.mxu0 0.0
        %903 = vmatprep.subr.mxu0 0.0
        %904 = vmatpush1.msra.mxu0 0.0
        %905 = vmatprep.subr.mxu0 0.0
        %906 = vmatpush1.msra.mxu0 0.0
        %907 = vmatprep.mubr.f32.mxu0 0.0
        %908 = vmatmul.mubr.f32.gmra.mrb[0].mxu0 %v760
        %v909 = vpop.f32.mrb[0].mxu0
        %v910 = vadd.f32 0.0, %v909
        %v911 = vpop.f32.mrb[0].mxu0
        %912 = vdwg.mxu0
        %913 = vst [vmem:[%s172] sm:$0xff] %v839
        %914 = vst [vmem:[%s172 + $0x8] sm:$0xff] %v841
        %vm915 = vcmask 244736
        %916 = vst.msk [vmem:[%s172 + $0x10] sm:$0xff] %vm915, %v910
        %s917 = sand.u32 %s75, 1
        %s918 = scalar_lea.sflag [#allocation6], %s917
        %s919 = sand.u32 %s75, 1
        %s920 = smul.addr %s919, 24
        %s921 = scalar_lea.vmem [#allocation9], %s920
        // Predicated region
        $region37: #{tpu_custom_call.1} parent=27 // pred_check
          %p922 = pneg %p85
        $region38: #{tpu_custom_call.1} parent=27 // pred_check_branch
          %924 = sbr.rel (%p922) target = $region40
        $region39: #{tpu_custom_call.1} parent=27 // pred_region
          %s926 = ssub.s32 384, 384
          %927 = vsyncadd %s918, %s926
          %s928 = smul.addr %s20, 3
          %s929 = smul.addr %s928, 128
          %s930 = scalar_lea.hbm %s2, %s929
          %s932 = sshll.u32 %s921, 4
          %s933 = int_to_ptr.vmem [resolvable:$true] %s932
          %935 = dma.vmem_to_hbm [thread:$0]  %s933, 384, %s930, %s918
        $region40: #{tpu_custom_call.1} parent=27 // pred_fallthru
          _
      $region28: #{tpu_custom_call.1} parent=5 // pred_fallthru
        _
      %p936 = scmp.le.s32.totalorder 2, %s15
      // Predicated region
      $region41: #{tpu_custom_call.1} parent=5 // pred_check
        %p937 = pneg %p936
      $region42: #{tpu_custom_call.1} parent=5 // pred_check_branch
        %939 = sbr.rel (%p937) target = $region44
      $region43: #{tpu_custom_call.1} parent=5 // pred_region
        %s940 = ssub.s32 %s15, 2
        // Predicated region
        $region45: #{tpu_custom_call.1} parent=43 // pred_check
          %p941 = pneg %p91
        $region46: #{tpu_custom_call.1} parent=43 // pred_check_branch
          %943 = sbr.rel (%p941) target = $region48
        $region47: #{tpu_custom_call.1} parent=43 // pred_region
          %s944 = sand.u32 %s76, 1
          %s945 = scalar_lea.sflag [#allocation6], %s944
          %s946 = sand.u32 %s76, 1
          %s947 = smul.addr %s946, 24
          %s948 = scalar_lea.vmem [#allocation9], %s947
          %949 = dma.done %s945, 384
        $region48: #{tpu_custom_call.1} parent=43 // pred_fallthru
          _
      $region44: #{tpu_custom_call.1} parent=5 // pred_fallthru
        _
    $region6: #{tpu_custom_call.1} parent=1 // loop_footer
      %s19 = sadd.s32 1, %s15
    $region7: #{tpu_custom_call.1} parent=1 // loop_footer_branch
      %14 = sbr.rel target = $region3
    $region8: #{tpu_custom_call.1} parent=1 // loop_exit
      _
    %950 = vsyncpa [#allocation5], 1
    %s951 = scalar_lea.sflag [#allocation5], 1
    %952 = vsyncpa %s951, 1
    %953 = vsyncpa [#allocation8], 1
    %954 = vsyncpa [#allocation6], 1
    %s955 = scalar_lea.sflag [#allocation6], 1
    %956 = vsyncpa %s955, 1

</llo_original>
